<compile_context>
chip_gen: v7x
topology: tpu7x:2x2x1
jax: 0.10.0
libtpu: 0.0.40
codegen_flags: <defaults>
</compile_context>

<pallas_src>
import math
import functools

import numpy as np
import jax
import jax.numpy as jnp
from jax.experimental import pallas as pl
from jax.experimental.pallas import tpu as pltpu


# ---------------------------------------------------------------------------
# Kernel 1: fused transformer block + output linear + BN partial statistics
# ---------------------------------------------------------------------------

def _fused_block_kernel(H, d, scale,
                        x_ref, wqkv_ref, bqkv_ref, wout_ref, bout_ref,
                        w1_ref, b1_ref, w2_ref, b2_ref, wo_ref, bo_ref,
                        y_ref, stats_ref):
    Nb, L, C = x_ref.shape
    M = Nb * L
    xf = x_ref[...].reshape(M, C)                                   # (M, C)

    # ---- QKV in-projection (single fused matmul, weights VMEM-resident) ----
    qkv = jnp.dot(xf, wqkv_ref[...],
                  preferred_element_type=jnp.float32) + bqkv_ref[...]   # (M, 3C)

    # ---- multi-head self-attention: static loop over heads, batched over Nb ----
    head_outs = []
    for h in range(H):
        q_lo = h * d
        k_lo = C + h * d
        v_lo = 2 * C + h * d
        qh = (qkv[:, q_lo:q_lo + d] * scale).reshape(Nb, L, d)
        kh = qkv[:, k_lo:k_lo + d].reshape(Nb, L, d)
        vh = qkv[:, v_lo:v_lo + d].reshape(Nb, L, d)
        # scores: (Nb, L, L), contracting head dim, batch over Nb (no .T materialized)
        s = jax.lax.dot_general(qh, kh, (((2,), (2,)), ((0,), (0,))),
                                preferred_element_type=jnp.float32)
        s = s - jnp.max(s, axis=-1, keepdims=True)
        p = jnp.exp(s)
        p = p * pl.reciprocal(jnp.sum(p, axis=-1, keepdims=True), approx=False)
        oh = jax.lax.dot_general(p, vh, (((2,), (1,)), ((0,), (0,))),
                                 preferred_element_type=jnp.float32)    # (Nb, L, d)
        head_outs.append(oh.reshape(M, d))
    attn = jnp.concatenate(head_outs, axis=-1)                          # (M, C)

    # ---- out-projection + residual (dropout p=0 -> identity) ----
    x1 = (jnp.dot(attn, wout_ref[...], preferred_element_type=jnp.float32)
          + bout_ref[...] + xf)

    # ---- feed-forward block + residual ----
    h1 = jnp.maximum(
        jnp.dot(x1, w1_ref[...], preferred_element_type=jnp.float32) + b1_ref[...],
        0.0)
    x2 = x1 + (jnp.dot(h1, w2_ref[...], preferred_element_type=jnp.float32)
               + b2_ref[...])

    # ---- output linear (BatchNorm + ReLU finalized in kernel 2) ----
    y = jnp.dot(x2, wo_ref[...], preferred_element_type=jnp.float32) + bo_ref[...]
    y_ref[...] = y.reshape(Nb, L, -1)

    # ---- per-tile BatchNorm partial statistics (sum, sum of squares) ----
    ssum = jnp.sum(y, axis=0, keepdims=True)        # (1, Cout)
    ssq = jnp.sum(y * y, axis=0, keepdims=True)     # (1, Cout)
    stats_ref[...] = jnp.concatenate([ssum, ssq], axis=0).reshape(1, 2, -1)


# ---------------------------------------------------------------------------
# Kernel 2: finalize BatchNorm (training-mode batch stats) + ReLU
# ---------------------------------------------------------------------------

def _bn_relu_kernel(eps, inv_m,
                    stats_ref, gamma_ref, beta_ref, y_ref, o_ref):
    G = stats_ref.shape[0]
    tot = stats_ref[0]                              # (2, Cout)
    for g in range(1, G):                           # G is small & static
        tot = tot + stats_ref[g]
    ssum = tot[0:1, :]                              # (1, Cout)
    ssq = tot[1:2, :]
    mean = ssum * inv_m
    var = ssq * inv_m - mean * mean
    inv_std = jax.lax.rsqrt(var + eps)
    scale = gamma_ref[...] * inv_std                # (1, Cout)
    shift = beta_ref[...] - mean * scale
    y = y_ref[...]                                  # (Nb, L, Cout)
    o_ref[...] = jnp.maximum(
        y * scale.reshape(1, 1, -1) + shift.reshape(1, 1, -1), 0.0)


# ---------------------------------------------------------------------------
# Tiling helper
# ---------------------------------------------------------------------------

def _pick_tile_n(N, L, C, Cff, Cout, budget_bytes=8 * 1024 * 1024):
    """Largest batch tile whose fused-kernel f32 intermediates fit a conservative
    VMEM budget (sized with v7x's 64 MiB VMEM / 32 MiB scoped default in mind),
    and which divides N evenly so BN statistics never include padded rows."""
    per_batch = 4 * (L * (9 * C + Cff + Cout) + L * L)  # rough live bytes / batch elem
    cap = max(1, budget_bytes // max(1, per_batch))
    for t in range(min(N, cap), 0, -1):
        if N % t == 0:
            return t
    return 1
    # TODO(synk): for N with no good divisor, pad + mask the BN partial sums.


# ---------------------------------------------------------------------------
# Forward pass
# ---------------------------------------------------------------------------

def attention3d_forward(x, params, num_heads, eps=1e-5):
    # x: (L, N, C_in) float32, sequence-first like nn.MultiheadAttention.
    L, N, C = x.shape
    H = num_heads
    assert C % H == 0
    d = C // H
    scale = 1.0 / math.sqrt(d)
    Cff = params["lin1_w"].shape[0]
    Cout = params["outl_w"].shape[0]

    # Batch-first so the big token axis is the leading grid axis and the channel
    # axis stays lane-dense; only the (small) input/output tensors are transposed,
    # every intermediate stays inside the fused kernel.
    xb = jnp.transpose(x, (1, 0, 2))                # (N, L, C)

    tile_n = _pick_tile_n(N, L, C, Cff, Cout)
    G = N // tile_n
    grid = (G,)

    # Pre-transposed weights (PyTorch stores (out, in)); biases as (1, dim).
    wqkv_t = params["in_proj_w"].T                  # (C, 3C)
    bqkv = params["in_proj_b"].reshape(1, 3 * C)
    wout_t = params["out_proj_w"].T                 # (C, C)
    bout = params["out_proj_b"].reshape(1, C)
    w1_t = params["lin1_w"].T                       # (C, Cff)
    b1 = params["lin1_b"].reshape(1, Cff)
    w2_t = params["lin2_w"].T                       # (Cff, C)
    b2 = params["lin2_b"].reshape(1, C)
    wo_t = params["outl_w"].T                       # (C, Cout)
    bo = params["outl_b"].reshape(1, Cout)
    gamma = params["bn_gamma"].reshape(1, Cout)
    beta = params["bn_beta"].reshape(1, Cout)

    tile_map = lambda i: (i, 0, 0)
    resident2 = lambda i: (0, 0)

    x_spec = pl.BlockSpec((tile_n, L, C), tile_map)
    y_spec = pl.BlockSpec((tile_n, L, Cout), tile_map)
    stats_out_spec = pl.BlockSpec((1, 2, Cout), tile_map)
    stats_in_spec = pl.BlockSpec((G, 2, Cout), lambda i: (0, 0, 0))

    def w_spec(a):
        return pl.BlockSpec(a.shape, resident2)

    kernel1 = functools.partial(_fused_block_kernel, H, d, scale)
    y, stats = pl.pallas_call(
        kernel1,
        grid=grid,
        in_specs=[x_spec,
                  w_spec(wqkv_t), w_spec(bqkv),
                  w_spec(wout_t), w_spec(bout),
                  w_spec(w1_t), w_spec(b1),
                  w_spec(w2_t), w_spec(b2),
                  w_spec(wo_t), w_spec(bo)],
        out_specs=(y_spec, stats_out_spec),
        out_shape=(jax.ShapeDtypeStruct((N, L, Cout), jnp.float32),
                   jax.ShapeDtypeStruct((G, 2, Cout), jnp.float32)),
        compiler_params=pltpu.CompilerParams(
            dimension_semantics=("parallel",)),
    )(xb, wqkv_t, bqkv, wout_t, bout, w1_t, b1, w2_t, b2, wo_t, bo)

    kernel2 = functools.partial(_bn_relu_kernel, eps, 1.0 / float(N * L))
    out_b = pl.pallas_call(
        kernel2,
        grid=grid,
        in_specs=[stats_in_spec, w_spec(gamma), w_spec(beta), y_spec],
        out_specs=y_spec,
        out_shape=jax.ShapeDtypeStruct((N, L, Cout), jnp.float32),
        compiler_params=pltpu.CompilerParams(
            dimension_semantics=("parallel",)),
    )(stats, gamma, beta, y)

    return jnp.transpose(out_b, (1, 0, 2))          # back to (L, N, Cout)


# ---------------------------------------------------------------------------
# Pure-JAX reference (correctness sanity check)
# ---------------------------------------------------------------------------

def reference_forward(x, p, num_heads, eps=1e-5):
    L, N, C = x.shape
    H = num_heads
    d = C // H
    xf = x.reshape(L * N, C)
    qkv = xf @ p["in_proj_w"].T + p["in_proj_b"]
    qkv = qkv.reshape(L, N, 3 * C)
    q, k, v = jnp.split(qkv, 3, axis=-1)
    qh = q.reshape(L, N * H, d).transpose(1, 0, 2) * (1.0 / math.sqrt(d))
    kh = k.reshape(L, N * H, d).transpose(1, 0, 2)
    vh = v.reshape(L, N * H, d).transpose(1, 0, 2)
    s = jnp.einsum("bld,bmd->blm", qh, kh)
    pmat = jax.nn.softmax(s, axis=-1)
    attn = jnp.einsum("blm,bmd->bld", pmat, vh)
    attn = attn.transpose(1, 0, 2).reshape(L * N, C)
    x1 = xf + (attn @ p["out_proj_w"].T + p["out_proj_b"])
    h1 = jnp.maximum(x1 @ p["lin1_w"].T + p["lin1_b"], 0.0)
    x2 = x1 + (h1 @ p["lin2_w"].T + p["lin2_b"])
    y = x2 @ p["outl_w"].T + p["outl_b"]
    mean = jnp.mean(y, axis=0, keepdims=True)
    var = jnp.mean(jnp.square(y - mean), axis=0, keepdims=True)
    out = jnp.maximum((y - mean) * jax.lax.rsqrt(var + eps) * p["bn_gamma"]
                      + p["bn_beta"], 0.0)
    return out.reshape(L, N, -1)


# ---------------------------------------------------------------------------
# Deterministic parameter init (shapes from Attention3d.__init__)
# ---------------------------------------------------------------------------

def init_params(key, c_in, c_out, c_ff):
    ks = jax.random.split(key, 10)
    s = 0.1
    return {
        "in_proj_w":  jax.random.normal(ks[0], (3 * c_in, c_in), jnp.float32) * s,
        "in_proj_b":  jax.random.normal(ks[1], (3 * c_in,), jnp.float32) * s,
        "out_proj_w": jax.random.normal(ks[2], (c_in, c_in), jnp.float32) * s,
        "out_proj_b": jax.random.normal(ks[3], (c_in,), jnp.float32) * s,
        "lin1_w":     jax.random.normal(ks[4], (c_ff, c_in), jnp.float32) * s,
        "lin1_b":     jax.random.normal(ks[5], (c_ff,), jnp.float32) * s,
        "lin2_w":     jax.random.normal(ks[6], (c_in, c_ff), jnp.float32) * s,
        "lin2_b":     jax.random.normal(ks[7], (c_in,), jnp.float32) * s,
        "outl_w":     jax.random.normal(ks[8], (c_out, c_in), jnp.float32) * s,
        "outl_b":     jax.random.normal(ks[9], (c_out,), jnp.float32) * s,
        "bn_gamma":   jnp.ones((c_out,), jnp.float32),
        "bn_beta":    jnp.zeros((c_out,), jnp.float32),
    }


if __name__ == "__main__":
    # Small config: input_channels=32, output_channels=16, ff_channels=64,
    # dropout=0.0 (identity), num_heads=4, seq L=8, batch N=2.
    C_IN, C_OUT, C_FF, HEADS = 32, 16, 64, 4
    L, N = 8, 2

    key = jax.random.PRNGKey(0)
    kx, kp = jax.random.split(key)
    x = jax.random.normal(kx, (L, N, C_IN), jnp.float32)
    params = init_params(kp, C_IN, C_OUT, C_FF)

    fwd = jax.jit(functools.partial(attention3d_forward, num_heads=HEADS))
    out = fwd(x, params)
    out = jax.block_until_ready(out)

    ref = reference_forward(x, params, HEADS)
    np.testing.assert_allclose(np.asarray(out), np.asarray(ref),
                               rtol=1e-4, atol=1e-4)
    assert out.shape == (L, N, C_OUT)
    print("KERNEL_OK")
</pallas_src>

<mosaic_0001>
module attributes {stable_mosaic.version = 11 : i64} {
  func.func @_bn_relu_kernel(%arg0: i32, %arg1: memref<1x2x16xf32, #tpu.memory_space<vmem>>, %arg2: memref<1x16xf32, #tpu.memory_space<vmem>>, %arg3: memref<1x16xf32, #tpu.memory_space<vmem>>, %arg4: memref<2x8x16xf32, #tpu.memory_space<vmem>>, %arg5: memref<2x8x16xf32, #tpu.memory_space<vmem>>) attributes {dimension_semantics = [#tpu.dimension_semantics<parallel>], iteration_bounds = array<i64: 1>, scalar_prefetch = 0 : i64, scratch_operands = 0 : i64, tpu.core_type = #tpu.core_type<tc>, window_params = [{pipeline_mode = #tpu.pipeline_mode<synchronous>, transform_indices = @transform_0, window_bounds = array<i64: 1, 2, 16>}, {pipeline_mode = #tpu.pipeline_mode<synchronous>, transform_indices = @transform_1, window_bounds = array<i64: 1, 16>}, {pipeline_mode = #tpu.pipeline_mode<synchronous>, transform_indices = @transform_2, window_bounds = array<i64: 1, 16>}, {transform_indices = @transform_3, window_bounds = array<i64: 2, 8, 16>}, {transform_indices = @transform_4, window_bounds = array<i64: 2, 8, 16>}]} {
    %c0 = arith.constant 0 : index
    %c0_0 = arith.constant 0 : index
    %c0_1 = arith.constant 0 : index
    %0 = vector.load %arg1[%c0, %c0_0, %c0_1] : memref<1x2x16xf32, #tpu.memory_space<vmem>>, vector<1x2x16xf32>
    %1 = vector.shape_cast %0 : vector<1x2x16xf32> to vector<2x16xf32>
    %2 = vector.extract_strided_slice %1 {offsets = [0, 0], sizes = [1, 16], strides = [1, 1]} : vector<2x16xf32> to vector<1x16xf32>
    %3 = vector.extract_strided_slice %1 {offsets = [1, 0], sizes = [1, 16], strides = [1, 1]} : vector<2x16xf32> to vector<1x16xf32>
    %cst = arith.constant 6.250000e-02 : f32
    %4 = vector.broadcast %cst : f32 to vector<1x16xf32>
    %5 = arith.mulf %2, %4 : vector<1x16xf32>
    %cst_2 = arith.constant 6.250000e-02 : f32
    %6 = vector.broadcast %cst_2 : f32 to vector<1x16xf32>
    %7 = arith.mulf %3, %6 : vector<1x16xf32>
    %8 = arith.mulf %5, %5 : vector<1x16xf32>
    %9 = arith.subf %7, %8 : vector<1x16xf32>
    %cst_3 = arith.constant 9.99999974E-6 : f32
    %10 = vector.broadcast %cst_3 : f32 to vector<1x16xf32>
    %11 = arith.addf %9, %10 : vector<1x16xf32>
    %12 = math.rsqrt %11 : vector<1x16xf32>
    %c0_4 = arith.constant 0 : index
    %c0_5 = arith.constant 0 : index
    %13 = vector.load %arg2[%c0_4, %c0_5] : memref<1x16xf32, #tpu.memory_space<vmem>>, vector<1x16xf32>
    %14 = arith.mulf %13, %12 : vector<1x16xf32>
    %c0_6 = arith.constant 0 : index
    %c0_7 = arith.constant 0 : index
    %15 = vector.load %arg3[%c0_6, %c0_7] : memref<1x16xf32, #tpu.memory_space<vmem>>, vector<1x16xf32>
    %16 = arith.mulf %5, %14 : vector<1x16xf32>
    %17 = arith.subf %15, %16 : vector<1x16xf32>
    %c0_8 = arith.constant 0 : index
    %c0_9 = arith.constant 0 : index
    %c0_10 = arith.constant 0 : index
    %18 = vector.load %arg4[%c0_8, %c0_9, %c0_10] : memref<2x8x16xf32, #tpu.memory_space<vmem>>, vector<2x8x16xf32>
    %19 = vector.shape_cast %14 : vector<1x16xf32> to vector<1x1x16xf32>
    %20 = vector.broadcast %19 : vector<1x1x16xf32> to vector<2x8x16xf32>
    %21 = arith.mulf %18, %20 : vector<2x8x16xf32>
    %22 = vector.shape_cast %17 : vector<1x16xf32> to vector<1x1x16xf32>
    %23 = vector.broadcast %22 : vector<1x1x16xf32> to vector<2x8x16xf32>
    %24 = arith.addf %21, %23 : vector<2x8x16xf32>
    %cst_11 = arith.constant 0.000000e+00 : f32
    %25 = vector.broadcast %cst_11 : f32 to vector<2x8x16xf32>
    %26 = arith.maximumf %24, %25 : vector<2x8x16xf32>
    %c0_12 = arith.constant 0 : index
    %c0_13 = arith.constant 0 : index
    %c0_14 = arith.constant 0 : index
    %27 = vector.load %arg5[%c0_12, %c0_13, %c0_14] : memref<2x8x16xf32, #tpu.memory_space<vmem>>, vector<2x8x16xf32>
    tpu.vector_store %arg5[%c0_12, %c0_13, %c0_14], %26 {strides = array<i32>} : memref<2x8x16xf32, #tpu.memory_space<vmem>>, vector<2x8x16xf32>,
    return
  }
  func.func @transform_0(%arg0: i32) -> (i32, i32, i32) {
    %c0_i32 = arith.constant 0 : i32
    %c0_i32_0 = arith.constant 0 : i32
    %c0_i32_1 = arith.constant 0 : i32
    %c0_i32_2 = arith.constant 0 : i32
    return %c0_i32, %c0_i32_0, %c0_i32_1 : i32, i32, i32
  }
  func.func @transform_1(%arg0: i32) -> (i32, i32) {
    %c0_i32 = arith.constant 0 : i32
    %c0_i32_0 = arith.constant 0 : i32
    %c0_i32_1 = arith.constant 0 : i32
    return %c0_i32, %c0_i32_0 : i32, i32
  }
  func.func @transform_2(%arg0: i32) -> (i32, i32) {
    %c0_i32 = arith.constant 0 : i32
    %c0_i32_0 = arith.constant 0 : i32
    %c0_i32_1 = arith.constant 0 : i32
    return %c0_i32, %c0_i32_0 : i32, i32
  }
  func.func @transform_3(%arg0: i32) -> (i32, i32, i32) {
    %c0_i32 = arith.constant 0 : i32
    %c0_i32_0 = arith.constant 0 : i32
    %c0_i32_1 = arith.constant 0 : i32
    return %arg0, %c0_i32, %c0_i32_0 : i32, i32, i32
  }
  func.func @transform_4(%arg0: i32) -> (i32, i32, i32) {
    %c0_i32 = arith.constant 0 : i32
    %c0_i32_0 = arith.constant 0 : i32
    %c0_i32_1 = arith.constant 0 : i32
    return %arg0, %c0_i32, %c0_i32_0 : i32, i32, i32
  }
}

module attributes {stable_mosaic.version = 11 : i64} {
  func.func @_fused_block_kernel(%arg0: i32, %arg1: memref<2x8x32xf32, #tpu.memory_space<vmem>>, %arg2: memref<32x96xf32, #tpu.memory_space<vmem>>, %arg3: memref<1x96xf32, #tpu.memory_space<vmem>>, %arg4: memref<32x32xf32, #tpu.memory_space<vmem>>, %arg5: memref<1x32xf32, #tpu.memory_space<vmem>>, %arg6: memref<32x64xf32, #tpu.memory_space<vmem>>, %arg7: memref<1x64xf32, #tpu.memory_space<vmem>>, %arg8: memref<64x32xf32, #tpu.memory_space<vmem>>, %arg9: memref<1x32xf32, #tpu.memory_space<vmem>>, %arg10: memref<32x16xf32, #tpu.memory_space<vmem>>, %arg11: memref<1x16xf32, #tpu.memory_space<vmem>>, %arg12: memref<2x8x16xf32, #tpu.memory_space<vmem>>, %arg13: memref<1x2x16xf32, #tpu.memory_space<vmem>>) attributes {dimension_semantics = [#tpu.dimension_semantics<parallel>], iteration_bounds = array<i64: 1>, scalar_prefetch = 0 : i64, scratch_operands = 0 : i64, tpu.core_type = #tpu.core_type<tc>, window_params = [{transform_indices = @transform_0, window_bounds = array<i64: 2, 8, 32>}, {pipeline_mode = #tpu.pipeline_mode<synchronous>, transform_indices = @transform_1, window_bounds = array<i64: 32, 96>}, {pipeline_mode = #tpu.pipeline_mode<synchronous>, transform_indices = @transform_2, window_bounds = array<i64: 1, 96>}, {pipeline_mode = #tpu.pipeline_mode<synchronous>, transform_indices = @transform_3, window_bounds = array<i64: 32, 32>}, {pipeline_mode = #tpu.pipeline_mode<synchronous>, transform_indices = @transform_4, window_bounds = array<i64: 1, 32>}, {pipeline_mode = #tpu.pipeline_mode<synchronous>, transform_indices = @transform_5, window_bounds = array<i64: 32, 64>}, {pipeline_mode = #tpu.pipeline_mode<synchronous>, transform_indices = @transform_6, window_bounds = array<i64: 1, 64>}, {pipeline_mode = #tpu.pipeline_mode<synchronous>, transform_indices = @transform_7, window_bounds = array<i64: 64, 32>}, {pipeline_mode = #tpu.pipeline_mode<synchronous>, transform_indices = @transform_8, window_bounds = array<i64: 1, 32>}, {pipeline_mode = #tpu.pipeline_mode<synchronous>, transform_indices = @transform_9, window_bounds = array<i64: 32, 16>}, {pipeline_mode = #tpu.pipeline_mode<synchronous>, transform_indices = @transform_10, window_bounds = array<i64: 1, 16>}, {transform_indices = @transform_11, window_bounds = array<i64: 2, 8, 16>}, {transform_indices = @transform_12, window_bounds = array<i64: 1, 2, 16>}]} {
    %c0 = arith.constant 0 : index
    %c0_0 = arith.constant 0 : index
    %c0_1 = arith.constant 0 : index
    %0 = vector.load %arg1[%c0, %c0_0, %c0_1] : memref<2x8x32xf32, #tpu.memory_space<vmem>>, vector<2x8x32xf32>
    %1 = vector.shape_cast %0 : vector<2x8x32xf32> to vector<16x32xf32>
    %c0_2 = arith.constant 0 : index
    %c0_3 = arith.constant 0 : index
    %2 = vector.load %arg2[%c0_2, %c0_3] : memref<32x96xf32, #tpu.memory_space<vmem>>, vector<32x96xf32>
    %cst = arith.constant dense<0.000000e+00> : vector<16x96xf32>
    %3 = tpu.matmul %1, %2, %cst {dimension_numbers = #tpu.dot_dimension_numbers<[1], [0], [0], [1], [0, 0, 1, 1], [], []>} : vector<16x32xf32>, vector<32x96xf32>, vector<16x96xf32> -> vector<16x96xf32>
    %c0_4 = arith.constant 0 : index
    %c0_5 = arith.constant 0 : index
    %4 = vector.load %arg3[%c0_4, %c0_5] : memref<1x96xf32, #tpu.memory_space<vmem>>, vector<1x96xf32>
    %5 = vector.broadcast %4 : vector<1x96xf32> to vector<16x96xf32>
    %6 = arith.addf %3, %5 : vector<16x96xf32>
    %7 = vector.extract_strided_slice %6 {offsets = [0, 0], sizes = [16, 8], strides = [1, 1]} : vector<16x96xf32> to vector<16x8xf32>
    %cst_6 = arith.constant 0.353553385 : f32
    %8 = vector.broadcast %cst_6 : f32 to vector<16x8xf32>
    %9 = arith.mulf %7, %8 : vector<16x8xf32>
    %10 = vector.shape_cast %9 : vector<16x8xf32> to vector<2x8x8xf32>
    %11 = vector.extract_strided_slice %6 {offsets = [0, 32], sizes = [16, 8], strides = [1, 1]} : vector<16x96xf32> to vector<16x8xf32>
    %12 = vector.shape_cast %11 : vector<16x8xf32> to vector<2x8x8xf32>
    %13 = vector.extract_strided_slice %6 {offsets = [0, 64], sizes = [16, 8], strides = [1, 1]} : vector<16x96xf32> to vector<16x8xf32>
    %14 = vector.shape_cast %13 : vector<16x8xf32> to vector<2x8x8xf32>
    %cst_7 = arith.constant dense<0.000000e+00> : vector<2x8x8xf32>
    %15 = tpu.matmul %10, %12, %cst_7 {dimension_numbers = #tpu.dot_dimension_numbers<[2], [2], [1], [1], [0, 0, 0, 1, 1, 1], [0], [0]>} : vector<2x8x8xf32>, vector<2x8x8xf32>, vector<2x8x8xf32> -> vector<2x8x8xf32>
    %cst_8 = arith.constant dense<0xFF800000> : vector<2x8xf32>
    %16 = vector.multi_reduction <maximumf>, %15, %cst_8 [2] : vector<2x8x8xf32> to vector<2x8xf32>
    %17 = vector.shape_cast %16 : vector<2x8xf32> to vector<2x8x1xf32>
    %18 = vector.broadcast %17 : vector<2x8x1xf32> to vector<2x8x8xf32>
    %19 = arith.subf %15, %18 : vector<2x8x8xf32>
    %20 = math.exp %19 : vector<2x8x8xf32>
    %cst_9 = arith.constant dense<0.000000e+00> : vector<2x8xf32>
    %21 = vector.multi_reduction <add>, %20, %cst_9 [2] : vector<2x8x8xf32> to vector<2x8xf32>
    %22 = vector.shape_cast %21 : vector<2x8xf32> to vector<2x8x1xf32>
    %23 = tpu.reciprocal %22 : vector<2x8x1xf32> -> vector<2x8x1xf32>
    %24 = vector.broadcast %23 : vector<2x8x1xf32> to vector<2x8x8xf32>
    %25 = arith.mulf %20, %24 : vector<2x8x8xf32>
    %cst_10 = arith.constant dense<0.000000e+00> : vector<2x8x8xf32>
    %26 = tpu.matmul %25, %14, %cst_10 {dimension_numbers = #tpu.dot_dimension_numbers<[2], [1], [1], [2], [0, 0, 0, 1, 1, 2], [0], [0]>} : vector<2x8x8xf32>, vector<2x8x8xf32>, vector<2x8x8xf32> -> vector<2x8x8xf32>
    %27 = vector.shape_cast %26 : vector<2x8x8xf32> to vector<16x8xf32>
    %28 = vector.extract_strided_slice %6 {offsets = [0, 8], sizes = [16, 8], strides = [1, 1]} : vector<16x96xf32> to vector<16x8xf32>
    %cst_11 = arith.constant 0.353553385 : f32
    %29 = vector.broadcast %cst_11 : f32 to vector<16x8xf32>
    %30 = arith.mulf %28, %29 : vector<16x8xf32>
    %31 = vector.shape_cast %30 : vector<16x8xf32> to vector<2x8x8xf32>
    %32 = vector.extract_strided_slice %6 {offsets = [0, 40], sizes = [16, 8], strides = [1, 1]} : vector<16x96xf32> to vector<16x8xf32>
    %33 = vector.shape_cast %32 : vector<16x8xf32> to vector<2x8x8xf32>
    %34 = vector.extract_strided_slice %6 {offsets = [0, 72], sizes = [16, 8], strides = [1, 1]} : vector<16x96xf32> to vector<16x8xf32>
    %35 = vector.shape_cast %34 : vector<16x8xf32> to vector<2x8x8xf32>
    %cst_12 = arith.constant dense<0.000000e+00> : vector<2x8x8xf32>
    %36 = tpu.matmul %31, %33, %cst_12 {dimension_numbers = #tpu.dot_dimension_numbers<[2], [2], [1], [1], [0, 0, 0, 1, 1, 1], [0], [0]>} : vector<2x8x8xf32>, vector<2x8x8xf32>, vector<2x8x8xf32> -> vector<2x8x8xf32>
    %cst_13 = arith.constant dense<0xFF800000> : vector<2x8xf32>
    %37 = vector.multi_reduction <maximumf>, %36, %cst_13 [2] : vector<2x8x8xf32> to vector<2x8xf32>
    %38 = vector.shape_cast %37 : vector<2x8xf32> to vector<2x8x1xf32>
    %39 = vector.broadcast %38 : vector<2x8x1xf32> to vector<2x8x8xf32>
    %40 = arith.subf %36, %39 : vector<2x8x8xf32>
    %41 = math.exp %40 : vector<2x8x8xf32>
    %cst_14 = arith.constant dense<0.000000e+00> : vector<2x8xf32>
    %42 = vector.multi_reduction <add>, %41, %cst_14 [2] : vector<2x8x8xf32> to vector<2x8xf32>
    %43 = vector.shape_cast %42 : vector<2x8xf32> to vector<2x8x1xf32>
    %44 = tpu.reciprocal %43 : vector<2x8x1xf32> -> vector<2x8x1xf32>
    %45 = vector.broadcast %44 : vector<2x8x1xf32> to vector<2x8x8xf32>
    %46 = arith.mulf %41, %45 : vector<2x8x8xf32>
    %cst_15 = arith.constant dense<0.000000e+00> : vector<2x8x8xf32>
    %47 = tpu.matmul %46, %35, %cst_15 {dimension_numbers = #tpu.dot_dimension_numbers<[2], [1], [1], [2], [0, 0, 0, 1, 1, 2], [0], [0]>} : vector<2x8x8xf32>, vector<2x8x8xf32>, vector<2x8x8xf32> -> vector<2x8x8xf32>
    %48 = vector.shape_cast %47 : vector<2x8x8xf32> to vector<16x8xf32>
    %49 = vector.extract_strided_slice %6 {offsets = [0, 16], sizes = [16, 8], strides = [1, 1]} : vector<16x96xf32> to vector<16x8xf32>
    %cst_16 = arith.constant 0.353553385 : f32
    %50 = vector.broadcast %cst_16 : f32 to vector<16x8xf32>
    %51 = arith.mulf %49, %50 : vector<16x8xf32>
    %52 = vector.shape_cast %51 : vector<16x8xf32> to vector<2x8x8xf32>
    %53 = vector.extract_strided_slice %6 {offsets = [0, 48], sizes = [16, 8], strides = [1, 1]} : vector<16x96xf32> to vector<16x8xf32>
    %54 = vector.shape_cast %53 : vector<16x8xf32> to vector<2x8x8xf32>
    %55 = vector.extract_strided_slice %6 {offsets = [0, 80], sizes = [16, 8], strides = [1, 1]} : vector<16x96xf32> to vector<16x8xf32>
    %56 = vector.shape_cast %55 : vector<16x8xf32> to vector<2x8x8xf32>
    %cst_17 = arith.constant dense<0.000000e+00> : vector<2x8x8xf32>
    %57 = tpu.matmul %52, %54, %cst_17 {dimension_numbers = #tpu.dot_dimension_numbers<[2], [2], [1], [1], [0, 0, 0, 1, 1, 1], [0], [0]>} : vector<2x8x8xf32>, vector<2x8x8xf32>, vector<2x8x8xf32> -> vector<2x8x8xf32>
    %cst_18 = arith.constant dense<0xFF800000> : vector<2x8xf32>
    %58 = vector.multi_reduction <maximumf>, %57, %cst_18 [2] : vector<2x8x8xf32> to vector<2x8xf32>
    %59 = vector.shape_cast %58 : vector<2x8xf32> to vector<2x8x1xf32>
    %60 = vector.broadcast %59 : vector<2x8x1xf32> to vector<2x8x8xf32>
    %61 = arith.subf %57, %60 : vector<2x8x8xf32>
    %62 = math.exp %61 : vector<2x8x8xf32>
    %cst_19 = arith.constant dense<0.000000e+00> : vector<2x8xf32>
    %63 = vector.multi_reduction <add>, %62, %cst_19 [2] : vector<2x8x8xf32> to vector<2x8xf32>
    %64 = vector.shape_cast %63 : vector<2x8xf32> to vector<2x8x1xf32>
    %65 = tpu.reciprocal %64 : vector<2x8x1xf32> -> vector<2x8x1xf32>
    %66 = vector.broadcast %65 : vector<2x8x1xf32> to vector<2x8x8xf32>
    %67 = arith.mulf %62, %66 : vector<2x8x8xf32>
    %cst_20 = arith.constant dense<0.000000e+00> : vector<2x8x8xf32>
    %68 = tpu.matmul %67, %56, %cst_20 {dimension_numbers = #tpu.dot_dimension_numbers<[2], [1], [1], [2], [0, 0, 0, 1, 1, 2], [0], [0]>} : vector<2x8x8xf32>, vector<2x8x8xf32>, vector<2x8x8xf32> -> vector<2x8x8xf32>
    %69 = vector.shape_cast %68 : vector<2x8x8xf32> to vector<16x8xf32>
    %70 = vector.extract_strided_slice %6 {offsets = [0, 24], sizes = [16, 8], strides = [1, 1]} : vector<16x96xf32> to vector<16x8xf32>
    %cst_21 = arith.constant 0.353553385 : f32
    %71 = vector.broadcast %cst_21 : f32 to vector<16x8xf32>
    %72 = arith.mulf %70, %71 : vector<16x8xf32>
    %73 = vector.shape_cast %72 : vector<16x8xf32> to vector<2x8x8xf32>
    %74 = vector.extract_strided_slice %6 {offsets = [0, 56], sizes = [16, 8], strides = [1, 1]} : vector<16x96xf32> to vector<16x8xf32>
    %75 = vector.shape_cast %74 : vector<16x8xf32> to vector<2x8x8xf32>
    %76 = vector.extract_strided_slice %6 {offsets = [0, 88], sizes = [16, 8], strides = [1, 1]} : vector<16x96xf32> to vector<16x8xf32>
    %77 = vector.shape_cast %76 : vector<16x8xf32> to vector<2x8x8xf32>
    %cst_22 = arith.constant dense<0.000000e+00> : vector<2x8x8xf32>
    %78 = tpu.matmul %73, %75, %cst_22 {dimension_numbers = #tpu.dot_dimension_numbers<[2], [2], [1], [1], [0, 0, 0, 1, 1, 1], [0], [0]>} : vector<2x8x8xf32>, vector<2x8x8xf32>, vector<2x8x8xf32> -> vector<2x8x8xf32>
    %cst_23 = arith.constant dense<0xFF800000> : vector<2x8xf32>
    %79 = vector.multi_reduction <maximumf>, %78, %cst_23 [2] : vector<2x8x8xf32> to vector<2x8xf32>
    %80 = vector.shape_cast %79 : vector<2x8xf32> to vector<2x8x1xf32>
    %81 = vector.broadcast %80 : vector<2x8x1xf32> to vector<2x8x8xf32>
    %82 = arith.subf %78, %81 : vector<2x8x8xf32>
    %83 = math.exp %82 : vector<2x8x8xf32>
    %cst_24 = arith.constant dense<0.000000e+00> : vector<2x8xf32>
    %84 = vector.multi_reduction <add>, %83, %cst_24 [2] : vector<2x8x8xf32> to vector<2x8xf32>
    %85 = vector.shape_cast %84 : vector<2x8xf32> to vector<2x8x1xf32>
    %86 = tpu.reciprocal %85 : vector<2x8x1xf32> -> vector<2x8x1xf32>
    %87 = vector.broadcast %86 : vector<2x8x1xf32> to vector<2x8x8xf32>
    %88 = arith.mulf %83, %87 : vector<2x8x8xf32>
    %cst_25 = arith.constant dense<0.000000e+00> : vector<2x8x8xf32>
    %89 = tpu.matmul %88, %77, %cst_25 {dimension_numbers = #tpu.dot_dimension_numbers<[2], [1], [1], [2], [0, 0, 0, 1, 1, 2], [0], [0]>} : vector<2x8x8xf32>, vector<2x8x8xf32>, vector<2x8x8xf32> -> vector<2x8x8xf32>
    %90 = vector.shape_cast %89 : vector<2x8x8xf32> to vector<16x8xf32>
    %91 = tpu.concatenate %27, %48, %69, %90 in 1 : vector<16x8xf32>, vector<16x8xf32>, vector<16x8xf32>, vector<16x8xf32> -> vector<16x32xf32>
    %c0_26 = arith.constant 0 : index
    %c0_27 = arith.constant 0 : index
    %92 = vector.load %arg4[%c0_26, %c0_27] : memref<32x32xf32, #tpu.memory_space<vmem>>, vector<32x32xf32>
    %cst_28 = arith.constant dense<0.000000e+00> : vector<16x32xf32>
    %93 = tpu.matmul %91, %92, %cst_28 {dimension_numbers = #tpu.dot_dimension_numbers<[1], [0], [0], [1], [0, 0, 1, 1], [], []>} : vector<16x32xf32>, vector<32x32xf32>, vector<16x32xf32> -> vector<16x32xf32>
    %c0_29 = arith.constant 0 : index
    %c0_30 = arith.constant 0 : index
    %94 = vector.load %arg5[%c0_29, %c0_30] : memref<1x32xf32, #tpu.memory_space<vmem>>, vector<1x32xf32>
    %95 = vector.broadcast %94 : vector<1x32xf32> to vector<16x32xf32>
    %96 = arith.addf %93, %95 : vector<16x32xf32>
    %97 = arith.addf %96, %1 : vector<16x32xf32>
    %c0_31 = arith.constant 0 : index
    %c0_32 = arith.constant 0 : index
    %98 = vector.load %arg6[%c0_31, %c0_32] : memref<32x64xf32, #tpu.memory_space<vmem>>, vector<32x64xf32>
    %cst_33 = arith.constant dense<0.000000e+00> : vector<16x64xf32>
    %99 = tpu.matmul %97, %98, %cst_33 {dimension_numbers = #tpu.dot_dimension_numbers<[1], [0], [0], [1], [0, 0, 1, 1], [], []>} : vector<16x32xf32>, vector<32x64xf32>, vector<16x64xf32> -> vector<16x64xf32>
    %c0_34 = arith.constant 0 : index
    %c0_35 = arith.constant 0 : index
    %100 = vector.load %arg7[%c0_34, %c0_35] : memref<1x64xf32, #tpu.memory_space<vmem>>, vector<1x64xf32>
    %101 = vector.broadcast %100 : vector<1x64xf32> to vector<16x64xf32>
    %102 = arith.addf %99, %101 : vector<16x64xf32>
    %cst_36 = arith.constant 0.000000e+00 : f32
    %103 = vector.broadcast %cst_36 : f32 to vector<16x64xf32>
    %104 = arith.maximumf %102, %103 : vector<16x64xf32>
    %c0_37 = arith.constant 0 : index
    %c0_38 = arith.constant 0 : index
    %105 = vector.load %arg8[%c0_37, %c0_38] : memref<64x32xf32, #tpu.memory_space<vmem>>, vector<64x32xf32>
    %cst_39 = arith.constant dense<0.000000e+00> : vector<16x32xf32>
    %106 = tpu.matmul %104, %105, %cst_39 {dimension_numbers = #tpu.dot_dimension_numbers<[1], [0], [0], [1], [0, 0, 1, 1], [], []>} : vector<16x64xf32>, vector<64x32xf32>, vector<16x32xf32> -> vector<16x32xf32>
    %c0_40 = arith.constant 0 : index
    %c0_41 = arith.constant 0 : index
    %107 = vector.load %arg9[%c0_40, %c0_41] : memref<1x32xf32, #tpu.memory_space<vmem>>, vector<1x32xf32>
    %108 = vector.broadcast %107 : vector<1x32xf32> to vector<16x32xf32>
    %109 = arith.addf %106, %108 : vector<16x32xf32>
    %110 = arith.addf %97, %109 : vector<16x32xf32>
    %c0_42 = arith.constant 0 : index
    %c0_43 = arith.constant 0 : index
    %111 = vector.load %arg10[%c0_42, %c0_43] : memref<32x16xf32, #tpu.memory_space<vmem>>, vector<32x16xf32>
    %cst_44 = arith.constant dense<0.000000e+00> : vector<16x16xf32>
    %112 = tpu.matmul %110, %111, %cst_44 {dimension_numbers = #tpu.dot_dimension_numbers<[1], [0], [0], [1], [0, 0, 1, 1], [], []>} : vector<16x32xf32>, vector<32x16xf32>, vector<16x16xf32> -> vector<16x16xf32>
    %c0_45 = arith.constant 0 : index
    %c0_46 = arith.constant 0 : index
    %113 = vector.load %arg11[%c0_45, %c0_46] : memref<1x16xf32, #tpu.memory_space<vmem>>, vector<1x16xf32>
    %114 = vector.broadcast %113 : vector<1x16xf32> to vector<16x16xf32>
    %115 = arith.addf %112, %114 : vector<16x16xf32>
    %116 = vector.shape_cast %115 : vector<16x16xf32> to vector<2x8x16xf32>
    %c0_47 = arith.constant 0 : index
    %c0_48 = arith.constant 0 : index
    %c0_49 = arith.constant 0 : index
    %117 = vector.load %arg12[%c0_47, %c0_48, %c0_49] : memref<2x8x16xf32, #tpu.memory_space<vmem>>, vector<2x8x16xf32>
    tpu.vector_store %arg12[%c0_47, %c0_48, %c0_49], %116 {strides = array<i32>} : memref<2x8x16xf32, #tpu.memory_space<vmem>>, vector<2x8x16xf32>,
    %cst_50 = arith.constant dense<0.000000e+00> : vector<16xf32>
    %118 = vector.multi_reduction <add>, %115, %cst_50 [0] : vector<16x16xf32> to vector<16xf32>
    %119 = vector.shape_cast %118 : vector<16xf32> to vector<1x16xf32>
    %120 = arith.mulf %115, %115 : vector<16x16xf32>
    %cst_51 = arith.constant dense<0.000000e+00> : vector<16xf32>
    %121 = vector.multi_reduction <add>, %120, %cst_51 [0] : vector<16x16xf32> to vector<16xf32>
    %122 = vector.shape_cast %121 : vector<16xf32> to vector<1x16xf32>
    %123 = tpu.concatenate %119, %122 in 0 : vector<1x16xf32>, vector<1x16xf32> -> vector<2x16xf32>
    %124 = vector.shape_cast %123 : vector<2x16xf32> to vector<1x2x16xf32>
    %c0_52 = arith.constant 0 : index
    %c0_53 = arith.constant 0 : index
    %c0_54 = arith.constant 0 : index
    %125 = vector.load %arg13[%c0_52, %c0_53, %c0_54] : memref<1x2x16xf32, #tpu.memory_space<vmem>>, vector<1x2x16xf32>
    tpu.vector_store %arg13[%c0_52, %c0_53, %c0_54], %124 {strides = array<i32>} : memref<1x2x16xf32, #tpu.memory_space<vmem>>, vector<1x2x16xf32>,
    return
  }
  func.func @transform_0(%arg0: i32) -> (i32, i32, i32) {
    %c0_i32 = arith.constant 0 : i32
    %c0_i32_0 = arith.constant 0 : i32
    %c0_i32_1 = arith.constant 0 : i32
    return %arg0, %c0_i32, %c0_i32_0 : i32, i32, i32
  }
  func.func @transform_1(%arg0: i32) -> (i32, i32) {
    %c0_i32 = arith.constant 0 : i32
    %c0_i32_0 = arith.constant 0 : i32
    %c0_i32_1 = arith.constant 0 : i32
    return %c0_i32, %c0_i32_0 : i32, i32
  }
  func.func @transform_2(%arg0: i32) -> (i32, i32) {
    %c0_i32 = arith.constant 0 : i32
    %c0_i32_0 = arith.constant 0 : i32
    %c0_i32_1 = arith.constant 0 : i32
    return %c0_i32, %c0_i32_0 : i32, i32
  }
  func.func @transform_3(%arg0: i32) -> (i32, i32) {
    %c0_i32 = arith.constant 0 : i32
    %c0_i32_0 = arith.constant 0 : i32
    %c0_i32_1 = arith.constant 0 : i32
    return %c0_i32, %c0_i32_0 : i32, i32
  }
  func.func @transform_4(%arg0: i32) -> (i32, i32) {
    %c0_i32 = arith.constant 0 : i32
    %c0_i32_0 = arith.constant 0 : i32
    %c0_i32_1 = arith.constant 0 : i32
    return %c0_i32, %c0_i32_0 : i32, i32
  }
  func.func @transform_5(%arg0: i32) -> (i32, i32) {
    %c0_i32 = arith.constant 0 : i32
    %c0_i32_0 = arith.constant 0 : i32
    %c0_i32_1 = arith.constant 0 : i32
    return %c0_i32, %c0_i32_0 : i32, i32
  }
  func.func @transform_6(%arg0: i32) -> (i32, i32) {
    %c0_i32 = arith.constant 0 : i32
    %c0_i32_0 = arith.constant 0 : i32
    %c0_i32_1 = arith.constant 0 : i32
    return %c0_i32, %c0_i32_0 : i32, i32
  }
  func.func @transform_7(%arg0: i32) -> (i32, i32) {
    %c0_i32 = arith.constant 0 : i32
    %c0_i32_0 = arith.constant 0 : i32
    %c0_i32_1 = arith.constant 0 : i32
    return %c0_i32, %c0_i32_0 : i32, i32
  }
  func.func @transform_8(%arg0: i32) -> (i32, i32) {
    %c0_i32 = arith.constant 0 : i32
    %c0_i32_0 = arith.constant 0 : i32
    %c0_i32_1 = arith.constant 0 : i32
    return %c0_i32, %c0_i32_0 : i32, i32
  }
  func.func @transform_9(%arg0: i32) -> (i32, i32) {
    %c0_i32 = arith.constant 0 : i32
    %c0_i32_0 = arith.constant 0 : i32
    %c0_i32_1 = arith.constant 0 : i32
    return %c0_i32, %c0_i32_0 : i32, i32
  }
  func.func @transform_10(%arg0: i32) -> (i32, i32) {
    %c0_i32 = arith.constant 0 : i32
    %c0_i32_0 = arith.constant 0 : i32
    %c0_i32_1 = arith.constant 0 : i32
    return %c0_i32, %c0_i32_0 : i32, i32
  }
  func.func @transform_11(%arg0: i32) -> (i32, i32, i32) {
    %c0_i32 = arith.constant 0 : i32
    %c0_i32_0 = arith.constant 0 : i32
    %c0_i32_1 = arith.constant 0 : i32
    return %arg0, %c0_i32, %c0_i32_0 : i32, i32, i32
  }
  func.func @transform_12(%arg0: i32) -> (i32, i32, i32) {
    %c0_i32 = arith.constant 0 : i32
    %c0_i32_0 = arith.constant 0 : i32
    %c0_i32_1 = arith.constant 0 : i32
    return %arg0, %c0_i32, %c0_i32_0 : i32, i32, i32
  }
}

</mosaic_0001>

<llo_original>
// kernel: attention3d_forward.3
$region0: #{attention3d_forward.3}
  #allocation0 [shape = 'u32[]', space=smem, size = 0x4, offset = 0x4, fixed_abs, tag = 'smem constant byte address 0x4 - core index']
  #allocation1 [shape = 'u32[144,128]{1,0:T(1,128)}', space=vmem, size = 0x12000, scoped, tag = 'internal scratch']
  %s0 = inlined_call_operand.vmem [shape: f32[1,2,16], index: 0, kind: input, shape index: {}]
  %s1 = inlined_call_operand.vmem [shape: f32[1,16], index: 1, kind: input, shape index: {}]
  %s2 = inlined_call_operand.vmem [shape: f32[1,16], index: 2, kind: input, shape index: {}]
  %s3 = inlined_call_operand.vmem [shape: f32[2,8,16], index: 3, kind: input, shape index: {}]
  %s4 = inlined_call_operand.vmem [shape: f32[2,8,16], index: 4, kind: output, shape index: {}]
  %s5 = sld [smem:[#allocation0]]
  $region26: #{attention3d_forward.3} parent=0
    _
  %s7 = ssub.s32 1, %s5
  %s8 = scalar_select 0, %s7, %s5
  // Predicated region
  $region2: #{attention3d_forward.3} parent=0 // pred_check
    _
  $region3: #{attention3d_forward.3} parent=0 // pred_check_branch
    %10 = sbr.rel (0) target = $region5
  $region4: #{attention3d_forward.3} parent=0 // pred_region
    _
  $region5: #{attention3d_forward.3} parent=0 // pred_fallthru
    _
  // Predicated region
  $region6: #{attention3d_forward.3} parent=0 // pred_check
    _
  $region7: #{attention3d_forward.3} parent=0 // pred_check_branch
    %12 = sbr.rel (0) target = $region9
  $region8: #{attention3d_forward.3} parent=0 // pred_region
    _
  $region9: #{attention3d_forward.3} parent=0 // pred_fallthru
    _
  // Predicated region
  $region10: #{attention3d_forward.3} parent=0 // pred_check
    _
  $region11: #{attention3d_forward.3} parent=0 // pred_check_branch
    %14 = sbr.rel (0) target = $region13
  $region12: #{attention3d_forward.3} parent=0 // pred_region
    _
  $region13: #{attention3d_forward.3} parent=0 // pred_fallthru
    _
  // Predicated region
  $region14: #{attention3d_forward.3} parent=0 // pred_check
    _
  $region15: #{attention3d_forward.3} parent=0 // pred_check_branch
    %16 = sbr.rel (0) target = $region17
  $region16: #{attention3d_forward.3} parent=0 // pred_region
    _
  $region17: #{attention3d_forward.3} parent=0 // pred_fallthru
    _
  %v17 = vld [vmem:[%s0] sm:$0x3]
  %v18 = vmul.f32 %v17, 0.0625
  %v19 = vmul.f32 %v18, %v18
  %v21 = vrot.slane %v19, 7
  %v23 = vsub.f32 %v18, %v21
  %v24 = vadd.f32 %v23, 1e-05
  %v25 = vrsqrt.pop %v24
  %v26 = vld [vmem:[%s1] sm:$0x1]
  %v29 = vunpack.c.l.s4 1966171168
  %v30 = vunpack.c.0.s8 %v29
  %v31 = vlaneseq
  %v32 = vshrl.u32 %v31, 7
  %v33 = vsub.s32 %v30, %v32
  %v34 = vrot.slane %v25, %v33
  %v35 = vcombine.high %v34, %v34
  %v37 = vunpack.c.l.s4 1966171168
  %v38 = vunpack.c.0.s8 %v37
  %v39 = vlaneseq
  %v40 = vshrl.u32 %v39, 7
  %v41 = vsub.s32 %v38, %v40
  %v42 = vrot.slane %v35, %v41
  %v44 = vmul.f32 %v26, %v42
  %v45 = vld [vmem:[%s2] sm:$0x1]
  %v46 = vmul.f32 %v18, %v44
  %v47 = vsub.f32 %v45, %v46
  %v48 = vld [vmem:[%s3] sm:$0xff]
  %v49 = vld [vmem:[%s3 + $0x8] sm:$0xff]
  %v51 = vlaneseq
  %v52 = vshrl.u32 %v51, 7
  %v53 = vsub.s32 0, %v52
  %v54 = vrot.slane %v44, %v53
  %v56 = vmul.f32 %v48, %v54
  %v57 = vmul.f32 %v49, %v54
  %v59 = vlaneseq
  %v60 = vshrl.u32 %v59, 7
  %v61 = vsub.s32 0, %v60
  %v62 = vrot.slane %v47, %v61
  %v64 = vadd.f32 %v56, %v62
  %v65 = vadd.f32 %v57, %v62
  %v66 = vmax.f32 %v64, 0.0
  %v67 = vmax.f32 %v65, 0.0
  %vm68 = vcmask 130048
  %69 = vst.msk [vmem:[%s4] sm:$0xff] %vm68, %v66
  %70 = vst.msk [vmem:[%s4 + $0x8] sm:$0xff] %vm68, %v67
  // Predicated region
  $region18: #{attention3d_forward.3} parent=0 // pred_check
    _
  $region19: #{attention3d_forward.3} parent=0 // pred_check_branch
    %72 = sbr.rel (0) target = $region21
  $region20: #{attention3d_forward.3} parent=0 // pred_region
    _
  $region21: #{attention3d_forward.3} parent=0 // pred_fallthru
    _
  // Predicated region
  $region22: #{attention3d_forward.3} parent=0 // pred_check
    _
  $region23: #{attention3d_forward.3} parent=0 // pred_check_branch
    %74 = sbr.rel (0) target = $region25
  $region24: #{attention3d_forward.3} parent=0 // pred_region
    _
  $region25: #{attention3d_forward.3} parent=0 // pred_fallthru
    _

// kernel: attention3d_forward.2
$region0: #{attention3d_forward.2}
  #allocation0 [shape = 'u32[]', space=smem, size = 0x4, offset = 0x4, fixed_abs, tag = 'smem constant byte address 0x4 - core index']
  #allocation1 [shape = 'u32[144,128]{1,0:T(1,128)}', space=vmem, size = 0x12000, scoped, tag = 'internal scratch']
  %s0 = inlined_call_operand.vmem [shape: f32[2,8,32], index: 0, kind: input, shape index: {}]
  %s1 = inlined_call_operand.vmem [shape: f32[32,96], index: 1, kind: input, shape index: {}]
  %s2 = inlined_call_operand.vmem [shape: f32[1,96], index: 2, kind: input, shape index: {}]
  %s3 = inlined_call_operand.vmem [shape: f32[32,32], index: 3, kind: input, shape index: {}]
  %s4 = inlined_call_operand.vmem [shape: f32[1,32], index: 4, kind: input, shape index: {}]
  %s5 = inlined_call_operand.vmem [shape: f32[32,64], index: 5, kind: input, shape index: {}]
  %s6 = inlined_call_operand.vmem [shape: f32[1,64], index: 6, kind: input, shape index: {}]
  %s7 = inlined_call_operand.vmem [shape: f32[64,32], index: 7, kind: input, shape index: {}]
  %s8 = inlined_call_operand.vmem [shape: f32[1,32], index: 8, kind: input, shape index: {}]
  %s9 = inlined_call_operand.vmem [shape: f32[32,16], index: 9, kind: input, shape index: {}]
  %s10 = inlined_call_operand.vmem [shape: f32[1,16], index: 10, kind: input, shape index: {}]
  %s11 = inlined_call_operand.vmem [shape: f32[2,8,16], index: 11, kind: output, shape index: {0}]
  %s12 = inlined_call_operand.vmem [shape: f32[1,2,16], index: 12, kind: output, shape index: {1}]
  %13 = xla_tuple %s11, %s12
  %s14 = sld [smem:[#allocation0]]
  $region62: #{attention3d_forward.2} parent=0
    _
  %s16 = ssub.s32 1, %s14
  %s17 = scalar_select 0, %s16, %s14
  // Predicated region
  $region2: #{attention3d_forward.2} parent=0 // pred_check
    _
  $region3: #{attention3d_forward.2} parent=0 // pred_check_branch
    %19 = sbr.rel (0) target = $region5
  $region4: #{attention3d_forward.2} parent=0 // pred_region
    _
  $region5: #{attention3d_forward.2} parent=0 // pred_fallthru
    _
  // Predicated region
  $region6: #{attention3d_forward.2} parent=0 // pred_check
    _
  $region7: #{attention3d_forward.2} parent=0 // pred_check_branch
    %21 = sbr.rel (0) target = $region9
  $region8: #{attention3d_forward.2} parent=0 // pred_region
    _
  $region9: #{attention3d_forward.2} parent=0 // pred_fallthru
    _
  // Predicated region
  $region10: #{attention3d_forward.2} parent=0 // pred_check
    _
  $region11: #{attention3d_forward.2} parent=0 // pred_check_branch
    %23 = sbr.rel (0) target = $region13
  $region12: #{attention3d_forward.2} parent=0 // pred_region
    _
  $region13: #{attention3d_forward.2} parent=0 // pred_fallthru
    _
  // Predicated region
  $region14: #{attention3d_forward.2} parent=0 // pred_check
    _
  $region15: #{attention3d_forward.2} parent=0 // pred_check_branch
    %25 = sbr.rel (0) target = $region17
  $region16: #{attention3d_forward.2} parent=0 // pred_region
    _
  $region17: #{attention3d_forward.2} parent=0 // pred_fallthru
    _
  // Predicated region
  $region18: #{attention3d_forward.2} parent=0 // pred_check
    _
  $region19: #{attention3d_forward.2} parent=0 // pred_check_branch
    %27 = sbr.rel (0) target = $region21
  $region20: #{attention3d_forward.2} parent=0 // pred_region
    _
  $region21: #{attention3d_forward.2} parent=0 // pred_fallthru
    _
  // Predicated region
  $region22: #{attention3d_forward.2} parent=0 // pred_check
    _
  $region23: #{attention3d_forward.2} parent=0 // pred_check_branch
    %29 = sbr.rel (0) target = $region25
  $region24: #{attention3d_forward.2} parent=0 // pred_region
    _
  $region25: #{attention3d_forward.2} parent=0 // pred_fallthru
    _
  // Predicated region
  $region26: #{attention3d_forward.2} parent=0 // pred_check
    _
  $region27: #{attention3d_forward.2} parent=0 // pred_check_branch
    %31 = sbr.rel (0) target = $region29
  $region28: #{attention3d_forward.2} parent=0 // pred_region
    _
  $region29: #{attention3d_forward.2} parent=0 // pred_fallthru
    _
  // Predicated region
  $region30: #{attention3d_forward.2} parent=0 // pred_check
    _
  $region31: #{attention3d_forward.2} parent=0 // pred_check_branch
    %33 = sbr.rel (0) target = $region33
  $region32: #{attention3d_forward.2} parent=0 // pred_region
    _
  $region33: #{attention3d_forward.2} parent=0 // pred_fallthru
    _
  // Predicated region
  $region34: #{attention3d_forward.2} parent=0 // pred_check
    _
  $region35: #{attention3d_forward.2} parent=0 // pred_check_branch
    %35 = sbr.rel (0) target = $region37
  $region36: #{attention3d_forward.2} parent=0 // pred_region
    _
  $region37: #{attention3d_forward.2} parent=0 // pred_fallthru
    _
  // Predicated region
  $region38: #{attention3d_forward.2} parent=0 // pred_check
    _
  $region39: #{attention3d_forward.2} parent=0 // pred_check_branch
    %37 = sbr.rel (0) target = $region41
  $region40: #{attention3d_forward.2} parent=0 // pred_region
    _
  $region41: #{attention3d_forward.2} parent=0 // pred_fallthru
    _
  // Predicated region
  $region42: #{attention3d_forward.2} parent=0 // pred_check
    _
  $region43: #{attention3d_forward.2} parent=0 // pred_check_branch
    %39 = sbr.rel (0) target = $region45
  $region44: #{attention3d_forward.2} parent=0 // pred_region
    _
  $region45: #{attention3d_forward.2} parent=0 // pred_fallthru
    _
  %v40 = vld [vmem:[%s0] sm:$0xff]
  %v41 = vld [vmem:[%s0 + $0x8] sm:$0xff]
  %v42 = vld [vmem:[%s1] sm:$0xff]
  %v43 = vld [vmem:[%s1 + $0x8] sm:$0xff]
  %v44 = vld [vmem:[%s1 + $0x10] sm:$0xff]
  %v45 = vld [vmem:[%s1 + $0x18] sm:$0xff]
  %v46 = vld [vmem:[%s2] sm:$0x1]
  %v48 = vlaneseq
  %v49 = vshrl.u32 %v48, 7
  %v50 = vsub.s32 0, %v49
  %v51 = vrot.slane %v46, %v50
  %vm53 = vcmask 261120
  %v55 = vsel %vm53, %v40, 0
  %v58 = vsel %vm53, %v41, 0
  %60 = vmatprep.subr.mxu0 0.0
  %61 = vmatpush1.msra.mxu0 %v42
  %62 = vmatprep.subr.mxu0 0.0
  %63 = vmatpush1.msra.mxu0 %v43
  %64 = vmatprep.subr.mxu0 0.0
  %65 = vmatpush1.msra.mxu0 %v44
  %66 = vmatprep.subr.mxu0 0.0
  %67 = vmatpush1.msra.mxu0 %v45
  %68 = vmatprep.subr.mxu0 0.0
  %69 = vmatpush1.msra.mxu0 0.0
  %70 = vmatprep.subr.mxu0 0.0
  %71 = vmatpush1.msra.mxu0 0.0
  %72 = vmatprep.subr.mxu0 0.0
  %73 = vmatpush1.msra.mxu0 0.0
  %74 = vmatprep.subr.mxu0 0.0
  %75 = vmatpush1.msra.mxu0 0.0
  %76 = vmatprep.subr.mxu0 0.0
  %77 = vmatpush1.msra.mxu0 0.0
  %78 = vmatprep.subr.mxu0 0.0
  %79 = vmatpush1.msra.mxu0 0.0
  %80 = vmatprep.subr.mxu0 0.0
  %81 = vmatpush1.msra.mxu0 0.0
  %82 = vmatprep.subr.mxu0 0.0
  %83 = vmatpush1.msra.mxu0 0.0
  %84 = vmatprep.subr.mxu0 0.0
  %85 = vmatpush1.msra.mxu0 0.0
  %86 = vmatprep.subr.mxu0 0.0
  %87 = vmatpush1.msra.mxu0 0.0
  %88 = vmatprep.subr.mxu0 0.0
  %89 = vmatpush1.msra.mxu0 0.0
  %90 = vmatprep.subr.mxu0 0.0
  %91 = vmatpush1.msra.mxu0 0.0
  %92 = vmatprep.subr.mxu0 0.0
  %93 = vmatpush1.msra.mxu0 0.0
  %94 = vmatprep.subr.mxu0 0.0
  %95 = vmatpush1.msra.mxu0 0.0
  %96 = vmatprep.subr.mxu0 0.0
  %97 = vmatpush1.msra.mxu0 0.0
  %98 = vmatprep.subr.mxu0 0.0
  %99 = vmatpush1.msra.mxu0 0.0
  %100 = vmatprep.subr.mxu0 0.0
  %101 = vmatpush1.msra.mxu0 0.0
  %102 = vmatprep.subr.mxu0 0.0
  %103 = vmatpush1.msra.mxu0 0.0
  %104 = vmatprep.subr.mxu0 0.0
  %105 = vmatpush1.msra.mxu0 0.0
  %106 = vmatprep.subr.mxu0 0.0
  %107 = vmatpush1.msra.mxu0 0.0
  %108 = vmatprep.subr.mxu0 0.0
  %109 = vmatpush1.msra.mxu0 0.0
  %110 = vmatprep.subr.mxu0 0.0
  %111 = vmatpush1.msra.mxu0 0.0
  %112 = vmatprep.subr.mxu0 0.0
  %113 = vmatpush1.msra.mxu0 0.0
  %114 = vmatprep.subr.mxu0 0.0
  %115 = vmatpush1.msra.mxu0 0.0
  %116 = vmatprep.subr.mxu0 0.0
  %117 = vmatpush1.msra.mxu0 0.0
  %118 = vmatprep.subr.mxu0 0.0
  %119 = vmatpush1.msra.mxu0 0.0
  %120 = vmatprep.subr.mxu0 0.0
  %121 = vmatpush1.msra.mxu0 0.0
  %122 = vmatprep.subr.mxu0 0.0
  %123 = vmatpush1.msra.mxu0 0.0
  %124 = vmatprep.mubr.f32.mxu0 0.0
  %125 = vmatmul.mubr.f32.gmra.mrb[0].mxu0 %v55
  %v126 = vpop.f32.mrb[0].mxu0
  %v127 = vadd.f32 %v51, %v126
  %v128 = vpop.f32.mrb[0].mxu0
  %129 = vmatprep.mubr.f32.mxu0 0.0
  %130 = vmatmul.mubr.f32.gmra.mrb[0].mxu0 %v58
  %v131 = vpop.f32.mrb[0].mxu0
  %v132 = vadd.f32 %v51, %v131
  %v133 = vpop.f32.mrb[0].mxu0
  %134 = vdwg.mxu0
  %v135 = vmul.f32 %v127, 0.35355338
  %v136 = vmul.f32 %v132, 0.35355338
  %138 = vrot.lane.b32.xlu0 %v127, 96
  %v139 = vpop.permute.xlu0 %138
  %vm140 = vcmask 64512
  %v142 = vsel %vm140, %v135, 0
  %v144 = vsel %vm140, %v139, 0
  %146 = vmatprep.subr.mxu0 0.0
  %147 = vmatpush1.xpose.msra.mxu0 %v144
  %148 = vmatprep.subr.mxu0 0.0
  %149 = vmatpush1.xpose.msra.mxu0 0.0
  %150 = vmatprep.subr.mxu0 0.0
  %151 = vmatpush1.xpose.msra.mxu0 0.0
  %152 = vmatprep.subr.mxu0 0.0
  %153 = vmatpush1.xpose.msra.mxu0 0.0
  %154 = vmatprep.subr.mxu0 0.0
  %155 = vmatpush1.xpose.msra.mxu0 0.0
  %156 = vmatprep.subr.mxu0 0.0
  %157 = vmatpush1.xpose.msra.mxu0 0.0
  %158 = vmatprep.subr.mxu0 0.0
  %159 = vmatpush1.xpose.msra.mxu0 0.0
  %160 = vmatprep.subr.mxu0 0.0
  %161 = vmatpush1.xpose.msra.mxu0 0.0
  %162 = vmatprep.subr.mxu0 0.0
  %163 = vmatpush1.xpose.msra.mxu0 0.0
  %164 = vmatprep.subr.mxu0 0.0
  %165 = vmatpush1.xpose.msra.mxu0 0.0
  %166 = vmatprep.subr.mxu0 0.0
  %167 = vmatpush1.xpose.msra.mxu0 0.0
  %168 = vmatprep.subr.mxu0 0.0
  %169 = vmatpush1.xpose.msra.mxu0 0.0
  %170 = vmatprep.subr.mxu0 0.0
  %171 = vmatpush1.xpose.msra.mxu0 0.0
  %172 = vmatprep.subr.mxu0 0.0
  %173 = vmatpush1.xpose.msra.mxu0 0.0
  %174 = vmatprep.subr.mxu0 0.0
  %175 = vmatpush1.xpose.msra.mxu0 0.0
  %176 = vmatprep.subr.mxu0 0.0
  %177 = vmatpush1.xpose.msra.mxu0 0.0
  %178 = vmatprep.subr.mxu0 0.0
  %179 = vmatpush1.xpose.msra.mxu0 0.0
  %180 = vmatprep.subr.mxu0 0.0
  %181 = vmatpush1.xpose.msra.mxu0 0.0
  %182 = vmatprep.subr.mxu0 0.0
  %183 = vmatpush1.xpose.msra.mxu0 0.0
  %184 = vmatprep.subr.mxu0 0.0
  %185 = vmatpush1.xpose.msra.mxu0 0.0
  %186 = vmatprep.subr.mxu0 0.0
  %187 = vmatpush1.xpose.msra.mxu0 0.0
  %188 = vmatprep.subr.mxu0 0.0
  %189 = vmatpush1.xpose.msra.mxu0 0.0
  %190 = vmatprep.subr.mxu0 0.0
  %191 = vmatpush1.xpose.msra.mxu0 0.0
  %192 = vmatprep.subr.mxu0 0.0
  %193 = vmatpush1.xpose.msra.mxu0 0.0
  %194 = vmatprep.subr.mxu0 0.0
  %195 = vmatpush1.xpose.msra.mxu0 0.0
  %196 = vmatprep.subr.mxu0 0.0
  %197 = vmatpush1.xpose.msra.mxu0 0.0
  %198 = vmatprep.subr.mxu0 0.0
  %199 = vmatpush1.xpose.msra.mxu0 0.0
  %200 = vmatprep.subr.mxu0 0.0
  %201 = vmatpush1.xpose.msra.mxu0 0.0
  %202 = vmatprep.subr.mxu0 0.0
  %203 = vmatpush1.xpose.msra.mxu0 0.0
  %204 = vmatprep.subr.mxu0 0.0
  %205 = vmatpush1.xpose.msra.mxu0 0.0
  %206 = vmatprep.subr.mxu0 0.0
  %207 = vmatpush1.xpose.msra.mxu0 0.0
  %208 = vmatprep.subr.mxu0 0.0
  %209 = vmatpush1.xpose.msra.mxu0 0.0
  %210 = vmatprep.mubr.f32.mxu0 0.0
  %211 = vmatmul.mubr.f32.gmra.mrb[0].mxu0 %v142
  %v212 = vpop.f32.mrb[0].mxu0
  %v213 = vadd.f32 0.0, %v212
  %v214 = vpop.f32.mrb[0].mxu0
  %215 = vdwg.mxu0
  %217 = vrot.lane.b32.xlu0 %v132, 96
  %v218 = vpop.permute.xlu0 %217
  %v220 = vsel %vm140, %v136, 0
  %v222 = vsel %vm140, %v218, 0
  %224 = vmatprep.subr.mxu0 0.0
  %225 = vmatpush1.xpose.msra.mxu0 %v222
  %226 = vmatprep.subr.mxu0 0.0
  %227 = vmatpush1.xpose.msra.mxu0 0.0
  %228 = vmatprep.subr.mxu0 0.0
  %229 = vmatpush1.xpose.msra.mxu0 0.0
  %230 = vmatprep.subr.mxu0 0.0
  %231 = vmatpush1.xpose.msra.mxu0 0.0
  %232 = vmatprep.subr.mxu0 0.0
  %233 = vmatpush1.xpose.msra.mxu0 0.0
  %234 = vmatprep.subr.mxu0 0.0
  %235 = vmatpush1.xpose.msra.mxu0 0.0
  %236 = vmatprep.subr.mxu0 0.0
  %237 = vmatpush1.xpose.msra.mxu0 0.0
  %238 = vmatprep.subr.mxu0 0.0
  %239 = vmatpush1.xpose.msra.mxu0 0.0
  %240 = vmatprep.subr.mxu0 0.0
  %241 = vmatpush1.xpose.msra.mxu0 0.0
  %242 = vmatprep.subr.mxu0 0.0
  %243 = vmatpush1.xpose.msra.mxu0 0.0
  %244 = vmatprep.subr.mxu0 0.0
  %245 = vmatpush1.xpose.msra.mxu0 0.0
  %246 = vmatprep.subr.mxu0 0.0
  %247 = vmatpush1.xpose.msra.mxu0 0.0
  %248 = vmatprep.subr.mxu0 0.0
  %249 = vmatpush1.xpose.msra.mxu0 0.0
  %250 = vmatprep.subr.mxu0 0.0
  %251 = vmatpush1.xpose.msra.mxu0 0.0
  %252 = vmatprep.subr.mxu0 0.0
  %253 = vmatpush1.xpose.msra.mxu0 0.0
  %254 = vmatprep.subr.mxu0 0.0
  %255 = vmatpush1.xpose.msra.mxu0 0.0
  %256 = vmatprep.subr.mxu0 0.0
  %257 = vmatpush1.xpose.msra.mxu0 0.0
  %258 = vmatprep.subr.mxu0 0.0
  %259 = vmatpush1.xpose.msra.mxu0 0.0
  %260 = vmatprep.subr.mxu0 0.0
  %261 = vmatpush1.xpose.msra.mxu0 0.0
  %262 = vmatprep.subr.mxu0 0.0
  %263 = vmatpush1.xpose.msra.mxu0 0.0
  %264 = vmatprep.subr.mxu0 0.0
  %265 = vmatpush1.xpose.msra.mxu0 0.0
  %266 = vmatprep.subr.mxu0 0.0
  %267 = vmatpush1.xpose.msra.mxu0 0.0
  %268 = vmatprep.subr.mxu0 0.0
  %269 = vmatpush1.xpose.msra.mxu0 0.0
  %270 = vmatprep.subr.mxu0 0.0
  %271 = vmatpush1.xpose.msra.mxu0 0.0
  %272 = vmatprep.subr.mxu0 0.0
  %273 = vmatpush1.xpose.msra.mxu0 0.0
  %274 = vmatprep.subr.mxu0 0.0
  %275 = vmatpush1.xpose.msra.mxu0 0.0
  %276 = vmatprep.subr.mxu0 0.0
  %277 = vmatpush1.xpose.msra.mxu0 0.0
  %278 = vmatprep.subr.mxu0 0.0
  %279 = vmatpush1.xpose.msra.mxu0 0.0
  %280 = vmatprep.subr.mxu0 0.0
  %281 = vmatpush1.xpose.msra.mxu0 0.0
  %282 = vmatprep.subr.mxu0 0.0
  %283 = vmatpush1.xpose.msra.mxu0 0.0
  %284 = vmatprep.subr.mxu0 0.0
  %285 = vmatpush1.xpose.msra.mxu0 0.0
  %286 = vmatprep.subr.mxu0 0.0
  %287 = vmatpush1.xpose.msra.mxu0 0.0
  %288 = vmatprep.mubr.f32.mxu0 0.0
  %289 = vmatmul.mubr.f32.gmra.mrb[0].mxu0 %v220
  %v290 = vpop.f32.mrb[0].mxu0
  %v291 = vadd.f32 0.0, %v290
  %v292 = vpop.f32.mrb[0].mxu0
  %293 = vdwg.mxu0
  %v294 = vsel %vm140, %v213, -inf
  %295 = vmax.xlane.f32.xlu0 %v294
  %v296 = vpop.xlane.xlu0 %295
  %v297 = vsel %vm140, %v291, -inf
  %298 = vmax.xlane.f32.xlu0 %v297
  %v299 = vpop.xlane.xlu0 %298
  %v300 = vsub.f32 %v213, %v296
  %v301 = vsub.f32 %v291, %v299
  %v302 = vmul.f32 %v300, 1.442695
  %v303 = vpow.pop %v302
  %v304 = vmul.f32 %v301, 1.442695
  %v305 = vpow.pop %v304
  %v306 = vsel %vm140, %v303, 0.0
  %307 = vadd.xlane.f32.xlu0 %v306
  %v308 = vpop.xlane.xlu0 %307
  %v309 = vsel %vm140, %v305, 0.0
  %310 = vadd.xlane.f32.xlu0 %v309
  %v311 = vpop.xlane.xlu0 %310
  %v312 = vrcp.pop %v308
  %v313 = vrcp.pop %v311
  %v314 = vmul.f32 %v303, %v312
  %v315 = vmul.f32 %v305, %v313
  %316 = vrot.lane.b32.xlu0 %v127, 64
  %v317 = vpop.permute.xlu0 %316
  %v320 = vsel %vm140, %v314, 0
  %322 = vmatprep.subr.mxu0 0.0
  %323 = vmatpush1.msra.mxu0 %v317
  %324 = vmatprep.subr.mxu0 0.0
  %325 = vmatpush1.msra.mxu0 0.0
  %326 = vmatprep.subr.mxu0 0.0
  %327 = vmatpush1.msra.mxu0 0.0
  %328 = vmatprep.subr.mxu0 0.0
  %329 = vmatpush1.msra.mxu0 0.0
  %330 = vmatprep.subr.mxu0 0.0
  %331 = vmatpush1.msra.mxu0 0.0
  %332 = vmatprep.subr.mxu0 0.0
  %333 = vmatpush1.msra.mxu0 0.0
  %334 = vmatprep.subr.mxu0 0.0
  %335 = vmatpush1.msra.mxu0 0.0
  %336 = vmatprep.subr.mxu0 0.0
  %337 = vmatpush1.msra.mxu0 0.0
  %338 = vmatprep.subr.mxu0 0.0
  %339 = vmatpush1.msra.mxu0 0.0
  %340 = vmatprep.subr.mxu0 0.0
  %341 = vmatpush1.msra.mxu0 0.0
  %342 = vmatprep.subr.mxu0 0.0
  %343 = vmatpush1.msra.mxu0 0.0
  %344 = vmatprep.subr.mxu0 0.0
  %345 = vmatpush1.msra.mxu0 0.0
  %346 = vmatprep.subr.mxu0 0.0
  %347 = vmatpush1.msra.mxu0 0.0
  %348 = vmatprep.subr.mxu0 0.0
  %349 = vmatpush1.msra.mxu0 0.0
  %350 = vmatprep.subr.mxu0 0.0
  %351 = vmatpush1.msra.mxu0 0.0
  %352 = vmatprep.subr.mxu0 0.0
  %353 = vmatpush1.msra.mxu0 0.0
  %354 = vmatprep.subr.mxu0 0.0
  %355 = vmatpush1.msra.mxu0 0.0
  %356 = vmatprep.subr.mxu0 0.0
  %357 = vmatpush1.msra.mxu0 0.0
  %358 = vmatprep.subr.mxu0 0.0
  %359 = vmatpush1.msra.mxu0 0.0
  %360 = vmatprep.subr.mxu0 0.0
  %361 = vmatpush1.msra.mxu0 0.0
  %362 = vmatprep.subr.mxu0 0.0
  %363 = vmatpush1.msra.mxu0 0.0
  %364 = vmatprep.subr.mxu0 0.0
  %365 = vmatpush1.msra.mxu0 0.0
  %366 = vmatprep.subr.mxu0 0.0
  %367 = vmatpush1.msra.mxu0 0.0
  %368 = vmatprep.subr.mxu0 0.0
  %369 = vmatpush1.msra.mxu0 0.0
  %370 = vmatprep.subr.mxu0 0.0
  %371 = vmatpush1.msra.mxu0 0.0
  %372 = vmatprep.subr.mxu0 0.0
  %373 = vmatpush1.msra.mxu0 0.0
  %374 = vmatprep.subr.mxu0 0.0
  %375 = vmatpush1.msra.mxu0 0.0
  %376 = vmatprep.subr.mxu0 0.0
  %377 = vmatpush1.msra.mxu0 0.0
  %378 = vmatprep.subr.mxu0 0.0
  %379 = vmatpush1.msra.mxu0 0.0
  %380 = vmatprep.subr.mxu0 0.0
  %381 = vmatpush1.msra.mxu0 0.0
  %382 = vmatprep.subr.mxu0 0.0
  %383 = vmatpush1.msra.mxu0 0.0
  %384 = vmatprep.subr.mxu0 0.0
  %385 = vmatpush1.msra.mxu0 0.0
  %386 = vmatprep.mubr.f32.mxu0 0.0
  %387 = vmatmul.mubr.f32.gmra.mrb[0].mxu0 %v320
  %v388 = vpop.f32.mrb[0].mxu0
  %v389 = vadd.f32 0.0, %v388
  %v390 = vpop.f32.mrb[0].mxu0
  %391 = vdwg.mxu0
  %392 = vrot.lane.b32.xlu0 %v132, 64
  %v393 = vpop.permute.xlu0 %392
  %v396 = vsel %vm140, %v315, 0
  %398 = vmatprep.subr.mxu0 0.0
  %399 = vmatpush1.msra.mxu0 %v393
  %400 = vmatprep.subr.mxu0 0.0
  %401 = vmatpush1.msra.mxu0 0.0
  %402 = vmatprep.subr.mxu0 0.0
  %403 = vmatpush1.msra.mxu0 0.0
  %404 = vmatprep.subr.mxu0 0.0
  %405 = vmatpush1.msra.mxu0 0.0
  %406 = vmatprep.subr.mxu0 0.0
  %407 = vmatpush1.msra.mxu0 0.0
  %408 = vmatprep.subr.mxu0 0.0
  %409 = vmatpush1.msra.mxu0 0.0
  %410 = vmatprep.subr.mxu0 0.0
  %411 = vmatpush1.msra.mxu0 0.0
  %412 = vmatprep.subr.mxu0 0.0
  %413 = vmatpush1.msra.mxu0 0.0
  %414 = vmatprep.subr.mxu0 0.0
  %415 = vmatpush1.msra.mxu0 0.0
  %416 = vmatprep.subr.mxu0 0.0
  %417 = vmatpush1.msra.mxu0 0.0
  %418 = vmatprep.subr.mxu0 0.0
  %419 = vmatpush1.msra.mxu0 0.0
  %420 = vmatprep.subr.mxu0 0.0
  %421 = vmatpush1.msra.mxu0 0.0
  %422 = vmatprep.subr.mxu0 0.0
  %423 = vmatpush1.msra.mxu0 0.0
  %424 = vmatprep.subr.mxu0 0.0
  %425 = vmatpush1.msra.mxu0 0.0
  %426 = vmatprep.subr.mxu0 0.0
  %427 = vmatpush1.msra.mxu0 0.0
  %428 = vmatprep.subr.mxu0 0.0
  %429 = vmatpush1.msra.mxu0 0.0
  %430 = vmatprep.subr.mxu0 0.0
  %431 = vmatpush1.msra.mxu0 0.0
  %432 = vmatprep.subr.mxu0 0.0
  %433 = vmatpush1.msra.mxu0 0.0
  %434 = vmatprep.subr.mxu0 0.0
  %435 = vmatpush1.msra.mxu0 0.0
  %436 = vmatprep.subr.mxu0 0.0
  %437 = vmatpush1.msra.mxu0 0.0
  %438 = vmatprep.subr.mxu0 0.0
  %439 = vmatpush1.msra.mxu0 0.0
  %440 = vmatprep.subr.mxu0 0.0
  %441 = vmatpush1.msra.mxu0 0.0
  %442 = vmatprep.subr.mxu0 0.0
  %443 = vmatpush1.msra.mxu0 0.0
  %444 = vmatprep.subr.mxu0 0.0
  %445 = vmatpush1.msra.mxu0 0.0
  %446 = vmatprep.subr.mxu0 0.0
  %447 = vmatpush1.msra.mxu0 0.0
  %448 = vmatprep.subr.mxu0 0.0
  %449 = vmatpush1.msra.mxu0 0.0
  %450 = vmatprep.subr.mxu0 0.0
  %451 = vmatpush1.msra.mxu0 0.0
  %452 = vmatprep.subr.mxu0 0.0
  %453 = vmatpush1.msra.mxu0 0.0
  %454 = vmatprep.subr.mxu0 0.0
  %455 = vmatpush1.msra.mxu0 0.0
  %456 = vmatprep.subr.mxu0 0.0
  %457 = vmatpush1.msra.mxu0 0.0
  %458 = vmatprep.subr.mxu0 0.0
  %459 = vmatpush1.msra.mxu0 0.0
  %460 = vmatprep.subr.mxu0 0.0
  %461 = vmatpush1.msra.mxu0 0.0
  %462 = vmatprep.mubr.f32.mxu0 0.0
  %463 = vmatmul.mubr.f32.gmra.mrb[0].mxu0 %v396
  %v464 = vpop.f32.mrb[0].mxu0
  %v465 = vadd.f32 0.0, %v464
  %v466 = vpop.f32.mrb[0].mxu0
  %467 = vdwg.mxu0
  %468 = vrot.lane.b32.xlu0 %v135, 120
  %v469 = vpop.permute.xlu0 %468
  %470 = vrot.lane.b32.xlu0 %v127, 88
  %v471 = vpop.permute.xlu0 %470
  %v472 = vsel %vm140, %v469, 0
  %v474 = vsel %vm140, %v471, 0
  %476 = vmatprep.subr.mxu0 0.0
  %477 = vmatpush1.xpose.msra.mxu0 %v474
  %478 = vmatprep.subr.mxu0 0.0
  %479 = vmatpush1.xpose.msra.mxu0 0.0
  %480 = vmatprep.subr.mxu0 0.0
  %481 = vmatpush1.xpose.msra.mxu0 0.0
  %482 = vmatprep.subr.mxu0 0.0
  %483 = vmatpush1.xpose.msra.mxu0 0.0
  %484 = vmatprep.subr.mxu0 0.0
  %485 = vmatpush1.xpose.msra.mxu0 0.0
  %486 = vmatprep.subr.mxu0 0.0
  %487 = vmatpush1.xpose.msra.mxu0 0.0
  %488 = vmatprep.subr.mxu0 0.0
  %489 = vmatpush1.xpose.msra.mxu0 0.0
  %490 = vmatprep.subr.mxu0 0.0
  %491 = vmatpush1.xpose.msra.mxu0 0.0
  %492 = vmatprep.subr.mxu0 0.0
  %493 = vmatpush1.xpose.msra.mxu0 0.0
  %494 = vmatprep.subr.mxu0 0.0
  %495 = vmatpush1.xpose.msra.mxu0 0.0
  %496 = vmatprep.subr.mxu0 0.0
  %497 = vmatpush1.xpose.msra.mxu0 0.0
  %498 = vmatprep.subr.mxu0 0.0
  %499 = vmatpush1.xpose.msra.mxu0 0.0
  %500 = vmatprep.subr.mxu0 0.0
  %501 = vmatpush1.xpose.msra.mxu0 0.0
  %502 = vmatprep.subr.mxu0 0.0
  %503 = vmatpush1.xpose.msra.mxu0 0.0
  %504 = vmatprep.subr.mxu0 0.0
  %505 = vmatpush1.xpose.msra.mxu0 0.0
  %506 = vmatprep.subr.mxu0 0.0
  %507 = vmatpush1.xpose.msra.mxu0 0.0
  %508 = vmatprep.subr.mxu0 0.0
  %509 = vmatpush1.xpose.msra.mxu0 0.0
  %510 = vmatprep.subr.mxu0 0.0
  %511 = vmatpush1.xpose.msra.mxu0 0.0
  %512 = vmatprep.subr.mxu0 0.0
  %513 = vmatpush1.xpose.msra.mxu0 0.0
  %514 = vmatprep.subr.mxu0 0.0
  %515 = vmatpush1.xpose.msra.mxu0 0.0
  %516 = vmatprep.subr.mxu0 0.0
  %517 = vmatpush1.xpose.msra.mxu0 0.0
  %518 = vmatprep.subr.mxu0 0.0
  %519 = vmatpush1.xpose.msra.mxu0 0.0
  %520 = vmatprep.subr.mxu0 0.0
  %521 = vmatpush1.xpose.msra.mxu0 0.0
  %522 = vmatprep.subr.mxu0 0.0
  %523 = vmatpush1.xpose.msra.mxu0 0.0
  %524 = vmatprep.subr.mxu0 0.0
  %525 = vmatpush1.xpose.msra.mxu0 0.0
  %526 = vmatprep.subr.mxu0 0.0
  %527 = vmatpush1.xpose.msra.mxu0 0.0
  %528 = vmatprep.subr.mxu0 0.0
  %529 = vmatpush1.xpose.msra.mxu0 0.0
  %530 = vmatprep.subr.mxu0 0.0
  %531 = vmatpush1.xpose.msra.mxu0 0.0
  %532 = vmatprep.subr.mxu0 0.0
  %533 = vmatpush1.xpose.msra.mxu0 0.0
  %534 = vmatprep.subr.mxu0 0.0
  %535 = vmatpush1.xpose.msra.mxu0 0.0
  %536 = vmatprep.subr.mxu0 0.0
  %537 = vmatpush1.xpose.msra.mxu0 0.0
  %538 = vmatprep.subr.mxu0 0.0
  %539 = vmatpush1.xpose.msra.mxu0 0.0
  %540 = vmatprep.mubr.f32.mxu0 0.0
  %541 = vmatmul.mubr.f32.gmra.mrb[0].mxu0 %v472
  %v542 = vpop.f32.mrb[0].mxu0
  %v543 = vadd.f32 0.0, %v542
  %v544 = vpop.f32.mrb[0].mxu0
  %545 = vdwg.mxu0
  %546 = vrot.lane.b32.xlu0 %v136, 120
  %v547 = vpop.permute.xlu0 %546
  %548 = vrot.lane.b32.xlu0 %v132, 88
  %v549 = vpop.permute.xlu0 %548
  %v550 = vsel %vm140, %v547, 0
  %v552 = vsel %vm140, %v549, 0
  %554 = vmatprep.subr.mxu0 0.0
  %555 = vmatpush1.xpose.msra.mxu0 %v552
  %556 = vmatprep.subr.mxu0 0.0
  %557 = vmatpush1.xpose.msra.mxu0 0.0
  %558 = vmatprep.subr.mxu0 0.0
  %559 = vmatpush1.xpose.msra.mxu0 0.0
  %560 = vmatprep.subr.mxu0 0.0
  %561 = vmatpush1.xpose.msra.mxu0 0.0
  %562 = vmatprep.subr.mxu0 0.0
  %563 = vmatpush1.xpose.msra.mxu0 0.0
  %564 = vmatprep.subr.mxu0 0.0
  %565 = vmatpush1.xpose.msra.mxu0 0.0
  %566 = vmatprep.subr.mxu0 0.0
  %567 = vmatpush1.xpose.msra.mxu0 0.0
  %568 = vmatprep.subr.mxu0 0.0
  %569 = vmatpush1.xpose.msra.mxu0 0.0
  %570 = vmatprep.subr.mxu0 0.0
  %571 = vmatpush1.xpose.msra.mxu0 0.0
  %572 = vmatprep.subr.mxu0 0.0
  %573 = vmatpush1.xpose.msra.mxu0 0.0
  %574 = vmatprep.subr.mxu0 0.0
  %575 = vmatpush1.xpose.msra.mxu0 0.0
  %576 = vmatprep.subr.mxu0 0.0
  %577 = vmatpush1.xpose.msra.mxu0 0.0
  %578 = vmatprep.subr.mxu0 0.0
  %579 = vmatpush1.xpose.msra.mxu0 0.0
  %580 = vmatprep.subr.mxu0 0.0
  %581 = vmatpush1.xpose.msra.mxu0 0.0
  %582 = vmatprep.subr.mxu0 0.0
  %583 = vmatpush1.xpose.msra.mxu0 0.0
  %584 = vmatprep.subr.mxu0 0.0
  %585 = vmatpush1.xpose.msra.mxu0 0.0
  %586 = vmatprep.subr.mxu0 0.0
  %587 = vmatpush1.xpose.msra.mxu0 0.0
  %588 = vmatprep.subr.mxu0 0.0
  %589 = vmatpush1.xpose.msra.mxu0 0.0
  %590 = vmatprep.subr.mxu0 0.0
  %591 = vmatpush1.xpose.msra.mxu0 0.0
  %592 = vmatprep.subr.mxu0 0.0
  %593 = vmatpush1.xpose.msra.mxu0 0.0
  %594 = vmatprep.subr.mxu0 0.0
  %595 = vmatpush1.xpose.msra.mxu0 0.0
  %596 = vmatprep.subr.mxu0 0.0
  %597 = vmatpush1.xpose.msra.mxu0 0.0
  %598 = vmatprep.subr.mxu0 0.0
  %599 = vmatpush1.xpose.msra.mxu0 0.0
  %600 = vmatprep.subr.mxu0 0.0
  %601 = vmatpush1.xpose.msra.mxu0 0.0
  %602 = vmatprep.subr.mxu0 0.0
  %603 = vmatpush1.xpose.msra.mxu0 0.0
  %604 = vmatprep.subr.mxu0 0.0
  %605 = vmatpush1.xpose.msra.mxu0 0.0
  %606 = vmatprep.subr.mxu0 0.0
  %607 = vmatpush1.xpose.msra.mxu0 0.0
  %608 = vmatprep.subr.mxu0 0.0
  %609 = vmatpush1.xpose.msra.mxu0 0.0
  %610 = vmatprep.subr.mxu0 0.0
  %611 = vmatpush1.xpose.msra.mxu0 0.0
  %612 = vmatprep.subr.mxu0 0.0
  %613 = vmatpush1.xpose.msra.mxu0 0.0
  %614 = vmatprep.subr.mxu0 0.0
  %615 = vmatpush1.xpose.msra.mxu0 0.0
  %616 = vmatprep.subr.mxu0 0.0
  %617 = vmatpush1.xpose.msra.mxu0 0.0
  %618 = vmatprep.mubr.f32.mxu0 0.0
  %619 = vmatmul.mubr.f32.gmra.mrb[0].mxu0 %v550
  %v620 = vpop.f32.mrb[0].mxu0
  %v621 = vadd.f32 0.0, %v620
  %v622 = vpop.f32.mrb[0].mxu0
  %623 = vdwg.mxu0
  %v624 = vsel %vm140, %v543, -inf
  %625 = vmax.xlane.f32.xlu0 %v624
  %v626 = vpop.xlane.xlu0 %625
  %v627 = vsel %vm140, %v621, -inf
  %628 = vmax.xlane.f32.xlu0 %v627
  %v629 = vpop.xlane.xlu0 %628
  %v630 = vsub.f32 %v543, %v626
  %v631 = vsub.f32 %v621, %v629
  %v632 = vmul.f32 %v630, 1.442695
  %v633 = vpow.pop %v632
  %v634 = vmul.f32 %v631, 1.442695
  %v635 = vpow.pop %v634
  %v636 = vsel %vm140, %v633, 0.0
  %637 = vadd.xlane.f32.xlu0 %v636
  %v638 = vpop.xlane.xlu0 %637
  %v639 = vsel %vm140, %v635, 0.0
  %640 = vadd.xlane.f32.xlu0 %v639
  %v641 = vpop.xlane.xlu0 %640
  %v642 = vrcp.pop %v638
  %v643 = vrcp.pop %v641
  %v644 = vmul.f32 %v633, %v642
  %v645 = vmul.f32 %v635, %v643
  %646 = vrot.lane.b32.xlu0 %v127, 56
  %v647 = vpop.permute.xlu0 %646
  %v650 = vsel %vm140, %v644, 0
  %652 = vmatprep.subr.mxu0 0.0
  %653 = vmatpush1.msra.mxu0 %v647
  %654 = vmatprep.subr.mxu0 0.0
  %655 = vmatpush1.msra.mxu0 0.0
  %656 = vmatprep.subr.mxu0 0.0
  %657 = vmatpush1.msra.mxu0 0.0
  %658 = vmatprep.subr.mxu0 0.0
  %659 = vmatpush1.msra.mxu0 0.0
  %660 = vmatprep.subr.mxu0 0.0
  %661 = vmatpush1.msra.mxu0 0.0
  %662 = vmatprep.subr.mxu0 0.0
  %663 = vmatpush1.msra.mxu0 0.0
  %664 = vmatprep.subr.mxu0 0.0
  %665 = vmatpush1.msra.mxu0 0.0
  %666 = vmatprep.subr.mxu0 0.0
  %667 = vmatpush1.msra.mxu0 0.0
  %668 = vmatprep.subr.mxu0 0.0
  %669 = vmatpush1.msra.mxu0 0.0
  %670 = vmatprep.subr.mxu0 0.0
  %671 = vmatpush1.msra.mxu0 0.0
  %672 = vmatprep.subr.mxu0 0.0
  %673 = vmatpush1.msra.mxu0 0.0
  %674 = vmatprep.subr.mxu0 0.0
  %675 = vmatpush1.msra.mxu0 0.0
  %676 = vmatprep.subr.mxu0 0.0
  %677 = vmatpush1.msra.mxu0 0.0
  %678 = vmatprep.subr.mxu0 0.0
  %679 = vmatpush1.msra.mxu0 0.0
  %680 = vmatprep.subr.mxu0 0.0
  %681 = vmatpush1.msra.mxu0 0.0
  %682 = vmatprep.subr.mxu0 0.0
  %683 = vmatpush1.msra.mxu0 0.0
  %684 = vmatprep.subr.mxu0 0.0
  %685 = vmatpush1.msra.mxu0 0.0
  %686 = vmatprep.subr.mxu0 0.0
  %687 = vmatpush1.msra.mxu0 0.0
  %688 = vmatprep.subr.mxu0 0.0
  %689 = vmatpush1.msra.mxu0 0.0
  %690 = vmatprep.subr.mxu0 0.0
  %691 = vmatpush1.msra.mxu0 0.0
  %692 = vmatprep.subr.mxu0 0.0
  %693 = vmatpush1.msra.mxu0 0.0
  %694 = vmatprep.subr.mxu0 0.0
  %695 = vmatpush1.msra.mxu0 0.0
  %696 = vmatprep.subr.mxu0 0.0
  %697 = vmatpush1.msra.mxu0 0.0
  %698 = vmatprep.subr.mxu0 0.0
  %699 = vmatpush1.msra.mxu0 0.0
  %700 = vmatprep.subr.mxu0 0.0
  %701 = vmatpush1.msra.mxu0 0.0
  %702 = vmatprep.subr.mxu0 0.0
  %703 = vmatpush1.msra.mxu0 0.0
  %704 = vmatprep.subr.mxu0 0.0
  %705 = vmatpush1.msra.mxu0 0.0
  %706 = vmatprep.subr.mxu0 0.0
  %707 = vmatpush1.msra.mxu0 0.0
  %708 = vmatprep.subr.mxu0 0.0
  %709 = vmatpush1.msra.mxu0 0.0
  %710 = vmatprep.subr.mxu0 0.0
  %711 = vmatpush1.msra.mxu0 0.0
  %712 = vmatprep.subr.mxu0 0.0
  %713 = vmatpush1.msra.mxu0 0.0
  %714 = vmatprep.subr.mxu0 0.0
  %715 = vmatpush1.msra.mxu0 0.0
  %716 = vmatprep.mubr.f32.mxu0 0.0
  %717 = vmatmul.mubr.f32.gmra.mrb[0].mxu0 %v650
  %v718 = vpop.f32.mrb[0].mxu0
  %v719 = vadd.f32 0.0, %v718
  %v720 = vpop.f32.mrb[0].mxu0
  %721 = vdwg.mxu0
  %722 = vrot.lane.b32.xlu0 %v132, 56
  %v723 = vpop.permute.xlu0 %722
  %v726 = vsel %vm140, %v645, 0
  %728 = vmatprep.subr.mxu0 0.0
  %729 = vmatpush1.msra.mxu0 %v723
  %730 = vmatprep.subr.mxu0 0.0
  %731 = vmatpush1.msra.mxu0 0.0
  %732 = vmatprep.subr.mxu0 0.0
  %733 = vmatpush1.msra.mxu0 0.0
  %734 = vmatprep.subr.mxu0 0.0
  %735 = vmatpush1.msra.mxu0 0.0
  %736 = vmatprep.subr.mxu0 0.0
  %737 = vmatpush1.msra.mxu0 0.0
  %738 = vmatprep.subr.mxu0 0.0
  %739 = vmatpush1.msra.mxu0 0.0
  %740 = vmatprep.subr.mxu0 0.0
  %741 = vmatpush1.msra.mxu0 0.0
  %742 = vmatprep.subr.mxu0 0.0
  %743 = vmatpush1.msra.mxu0 0.0
  %744 = vmatprep.subr.mxu0 0.0
  %745 = vmatpush1.msra.mxu0 0.0
  %746 = vmatprep.subr.mxu0 0.0
  %747 = vmatpush1.msra.mxu0 0.0
  %748 = vmatprep.subr.mxu0 0.0
  %749 = vmatpush1.msra.mxu0 0.0
  %750 = vmatprep.subr.mxu0 0.0
  %751 = vmatpush1.msra.mxu0 0.0
  %752 = vmatprep.subr.mxu0 0.0
  %753 = vmatpush1.msra.mxu0 0.0
  %754 = vmatprep.subr.mxu0 0.0
  %755 = vmatpush1.msra.mxu0 0.0
  %756 = vmatprep.subr.mxu0 0.0
  %757 = vmatpush1.msra.mxu0 0.0
  %758 = vmatprep.subr.mxu0 0.0
  %759 = vmatpush1.msra.mxu0 0.0
  %760 = vmatprep.subr.mxu0 0.0
  %761 = vmatpush1.msra.mxu0 0.0
  %762 = vmatprep.subr.mxu0 0.0
  %763 = vmatpush1.msra.mxu0 0.0
  %764 = vmatprep.subr.mxu0 0.0
  %765 = vmatpush1.msra.mxu0 0.0
  %766 = vmatprep.subr.mxu0 0.0
  %767 = vmatpush1.msra.mxu0 0.0
  %768 = vmatprep.subr.mxu0 0.0
  %769 = vmatpush1.msra.mxu0 0.0
  %770 = vmatprep.subr.mxu0 0.0
  %771 = vmatpush1.msra.mxu0 0.0
  %772 = vmatprep.subr.mxu0 0.0
  %773 = vmatpush1.msra.mxu0 0.0
  %774 = vmatprep.subr.mxu0 0.0
  %775 = vmatpush1.msra.mxu0 0.0
  %776 = vmatprep.subr.mxu0 0.0
  %777 = vmatpush1.msra.mxu0 0.0
  %778 = vmatprep.subr.mxu0 0.0
  %779 = vmatpush1.msra.mxu0 0.0
  %780 = vmatprep.subr.mxu0 0.0
  %781 = vmatpush1.msra.mxu0 0.0
  %782 = vmatprep.subr.mxu0 0.0
  %783 = vmatpush1.msra.mxu0 0.0
  %784 = vmatprep.subr.mxu0 0.0
  %785 = vmatpush1.msra.mxu0 0.0
  %786 = vmatprep.subr.mxu0 0.0
  %787 = vmatpush1.msra.mxu0 0.0
  %788 = vmatprep.subr.mxu0 0.0
  %789 = vmatpush1.msra.mxu0 0.0
  %790 = vmatprep.subr.mxu0 0.0
  %791 = vmatpush1.msra.mxu0 0.0
  %792 = vmatprep.mubr.f32.mxu0 0.0
  %793 = vmatmul.mubr.f32.gmra.mrb[0].mxu0 %v726
  %v794 = vpop.f32.mrb[0].mxu0
  %v795 = vadd.f32 0.0, %v794
  %v796 = vpop.f32.mrb[0].mxu0
  %797 = vdwg.mxu0
  %798 = vrot.lane.b32.xlu0 %v135, 112
  %v799 = vpop.permute.xlu0 %798
  %800 = vrot.lane.b32.xlu0 %v127, 80
  %v801 = vpop.permute.xlu0 %800
  %v802 = vsel %vm140, %v799, 0
  %v804 = vsel %vm140, %v801, 0
  %806 = vmatprep.subr.mxu0 0.0
  %807 = vmatpush1.xpose.msra.mxu0 %v804
  %808 = vmatprep.subr.mxu0 0.0
  %809 = vmatpush1.xpose.msra.mxu0 0.0
  %810 = vmatprep.subr.mxu0 0.0
  %811 = vmatpush1.xpose.msra.mxu0 0.0
  %812 = vmatprep.subr.mxu0 0.0
  %813 = vmatpush1.xpose.msra.mxu0 0.0
  %814 = vmatprep.subr.mxu0 0.0
  %815 = vmatpush1.xpose.msra.mxu0 0.0
  %816 = vmatprep.subr.mxu0 0.0
  %817 = vmatpush1.xpose.msra.mxu0 0.0
  %818 = vmatprep.subr.mxu0 0.0
  %819 = vmatpush1.xpose.msra.mxu0 0.0
  %820 = vmatprep.subr.mxu0 0.0
  %821 = vmatpush1.xpose.msra.mxu0 0.0
  %822 = vmatprep.subr.mxu0 0.0
  %823 = vmatpush1.xpose.msra.mxu0 0.0
  %824 = vmatprep.subr.mxu0 0.0
  %825 = vmatpush1.xpose.msra.mxu0 0.0
  %826 = vmatprep.subr.mxu0 0.0
  %827 = vmatpush1.xpose.msra.mxu0 0.0
  %828 = vmatprep.subr.mxu0 0.0
  %829 = vmatpush1.xpose.msra.mxu0 0.0
  %830 = vmatprep.subr.mxu0 0.0
  %831 = vmatpush1.xpose.msra.mxu0 0.0
  %832 = vmatprep.subr.mxu0 0.0
  %833 = vmatpush1.xpose.msra.mxu0 0.0
  %834 = vmatprep.subr.mxu0 0.0
  %835 = vmatpush1.xpose.msra.mxu0 0.0
  %836 = vmatprep.subr.mxu0 0.0
  %837 = vmatpush1.xpose.msra.mxu0 0.0
  %838 = vmatprep.subr.mxu0 0.0
  %839 = vmatpush1.xpose.msra.mxu0 0.0
  %840 = vmatprep.subr.mxu0 0.0
  %841 = vmatpush1.xpose.msra.mxu0 0.0
  %842 = vmatprep.subr.mxu0 0.0
  %843 = vmatpush1.xpose.msra.mxu0 0.0
  %844 = vmatprep.subr.mxu0 0.0
  %845 = vmatpush1.xpose.msra.mxu0 0.0
  %846 = vmatprep.subr.mxu0 0.0
  %847 = vmatpush1.xpose.msra.mxu0 0.0
  %848 = vmatprep.subr.mxu0 0.0
  %849 = vmatpush1.xpose.msra.mxu0 0.0
  %850 = vmatprep.subr.mxu0 0.0
  %851 = vmatpush1.xpose.msra.mxu0 0.0
  %852 = vmatprep.subr.mxu0 0.0
  %853 = vmatpush1.xpose.msra.mxu0 0.0
  %854 = vmatprep.subr.mxu0 0.0
  %855 = vmatpush1.xpose.msra.mxu0 0.0
  %856 = vmatprep.subr.mxu0 0.0
  %857 = vmatpush1.xpose.msra.mxu0 0.0
  %858 = vmatprep.subr.mxu0 0.0
  %859 = vmatpush1.xpose.msra.mxu0 0.0
  %860 = vmatprep.subr.mxu0 0.0
  %861 = vmatpush1.xpose.msra.mxu0 0.0
  %862 = vmatprep.subr.mxu0 0.0
  %863 = vmatpush1.xpose.msra.mxu0 0.0
  %864 = vmatprep.subr.mxu0 0.0
  %865 = vmatpush1.xpose.msra.mxu0 0.0
  %866 = vmatprep.subr.mxu0 0.0
  %867 = vmatpush1.xpose.msra.mxu0 0.0
  %868 = vmatprep.subr.mxu0 0.0
  %869 = vmatpush1.xpose.msra.mxu0 0.0
  %870 = vmatprep.mubr.f32.mxu0 0.0
  %871 = vmatmul.mubr.f32.gmra.mrb[0].mxu0 %v802
  %v872 = vpop.f32.mrb[0].mxu0
  %v873 = vadd.f32 0.0, %v872
  %v874 = vpop.f32.mrb[0].mxu0
  %875 = vdwg.mxu0
  %876 = vrot.lane.b32.xlu0 %v136, 112
  %v877 = vpop.permute.xlu0 %876
  %878 = vrot.lane.b32.xlu0 %v132, 80
  %v879 = vpop.permute.xlu0 %878
  %v880 = vsel %vm140, %v877, 0
  %v882 = vsel %vm140, %v879, 0
  %884 = vmatprep.subr.mxu0 0.0
  %885 = vmatpush1.xpose.msra.mxu0 %v882
  %886 = vmatprep.subr.mxu0 0.0
  %887 = vmatpush1.xpose.msra.mxu0 0.0
  %888 = vmatprep.subr.mxu0 0.0
  %889 = vmatpush1.xpose.msra.mxu0 0.0
  %890 = vmatprep.subr.mxu0 0.0
  %891 = vmatpush1.xpose.msra.mxu0 0.0
  %892 = vmatprep.subr.mxu0 0.0
  %893 = vmatpush1.xpose.msra.mxu0 0.0
  %894 = vmatprep.subr.mxu0 0.0
  %895 = vmatpush1.xpose.msra.mxu0 0.0
  %896 = vmatprep.subr.mxu0 0.0
  %897 = vmatpush1.xpose.msra.mxu0 0.0
  %898 = vmatprep.subr.mxu0 0.0
  %899 = vmatpush1.xpose.msra.mxu0 0.0
  %900 = vmatprep.subr.mxu0 0.0
  %901 = vmatpush1.xpose.msra.mxu0 0.0
  %902 = vmatprep.subr.mxu0 0.0
  %903 = vmatpush1.xpose.msra.mxu0 0.0
  %904 = vmatprep.subr.mxu0 0.0
  %905 = vmatpush1.xpose.msra.mxu0 0.0
  %906 = vmatprep.subr.mxu0 0.0
  %907 = vmatpush1.xpose.msra.mxu0 0.0
  %908 = vmatprep.subr.mxu0 0.0
  %909 = vmatpush1.xpose.msra.mxu0 0.0
  %910 = vmatprep.subr.mxu0 0.0
  %911 = vmatpush1.xpose.msra.mxu0 0.0
  %912 = vmatprep.subr.mxu0 0.0
  %913 = vmatpush1.xpose.msra.mxu0 0.0
  %914 = vmatprep.subr.mxu0 0.0
  %915 = vmatpush1.xpose.msra.mxu0 0.0
  %916 = vmatprep.subr.mxu0 0.0
  %917 = vmatpush1.xpose.msra.mxu0 0.0
  %918 = vmatprep.subr.mxu0 0.0
  %919 = vmatpush1.xpose.msra.mxu0 0.0
  %920 = vmatprep.subr.mxu0 0.0
  %921 = vmatpush1.xpose.msra.mxu0 0.0
  %922 = vmatprep.subr.mxu0 0.0
  %923 = vmatpush1.xpose.msra.mxu0 0.0
  %924 = vmatprep.subr.mxu0 0.0
  %925 = vmatpush1.xpose.msra.mxu0 0.0
  %926 = vmatprep.subr.mxu0 0.0
  %927 = vmatpush1.xpose.msra.mxu0 0.0
  %928 = vmatprep.subr.mxu0 0.0
  %929 = vmatpush1.xpose.msra.mxu0 0.0
  %930 = vmatprep.subr.mxu0 0.0
  %931 = vmatpush1.xpose.msra.mxu0 0.0
  %932 = vmatprep.subr.mxu0 0.0
  %933 = vmatpush1.xpose.msra.mxu0 0.0
  %934 = vmatprep.subr.mxu0 0.0
  %935 = vmatpush1.xpose.msra.mxu0 0.0
  %936 = vmatprep.subr.mxu0 0.0
  %937 = vmatpush1.xpose.msra.mxu0 0.0
  %938 = vmatprep.subr.mxu0 0.0
  %939 = vmatpush1.xpose.msra.mxu0 0.0
  %940 = vmatprep.subr.mxu0 0.0
  %941 = vmatpush1.xpose.msra.mxu0 0.0
  %942 = vmatprep.subr.mxu0 0.0
  %943 = vmatpush1.xpose.msra.mxu0 0.0
  %944 = vmatprep.subr.mxu0 0.0
  %945 = vmatpush1.xpose.msra.mxu0 0.0
  %946 = vmatprep.subr.mxu0 0.0
  %947 = vmatpush1.xpose.msra.mxu0 0.0
  %948 = vmatprep.mubr.f32.mxu0 0.0
  %949 = vmatmul.mubr.f32.gmra.mrb[0].mxu0 %v880
  %v950 = vpop.f32.mrb[0].mxu0
  %v951 = vadd.f32 0.0, %v950
  %v952 = vpop.f32.mrb[0].mxu0
  %953 = vdwg.mxu0
  %v954 = vsel %vm140, %v873, -inf
  %955 = vmax.xlane.f32.xlu0 %v954
  %v956 = vpop.xlane.xlu0 %955
  %v957 = vsel %vm140, %v951, -inf
  %958 = vmax.xlane.f32.xlu0 %v957
  %v959 = vpop.xlane.xlu0 %958
  %v960 = vsub.f32 %v873, %v956
  %v961 = vsub.f32 %v951, %v959
  %v962 = vmul.f32 %v960, 1.442695
  %v963 = vpow.pop %v962
  %v964 = vmul.f32 %v961, 1.442695
  %v965 = vpow.pop %v964
  %v966 = vsel %vm140, %v963, 0.0
  %967 = vadd.xlane.f32.xlu0 %v966
  %v968 = vpop.xlane.xlu0 %967
  %v969 = vsel %vm140, %v965, 0.0
  %970 = vadd.xlane.f32.xlu0 %v969
  %v971 = vpop.xlane.xlu0 %970
  %v972 = vrcp.pop %v968
  %v973 = vrcp.pop %v971
  %v974 = vmul.f32 %v963, %v972
  %v975 = vmul.f32 %v965, %v973
  %976 = vrot.lane.b32.xlu0 %v127, 48
  %v977 = vpop.permute.xlu0 %976
  %v980 = vsel %vm140, %v974, 0
  %982 = vmatprep.subr.mxu0 0.0
  %983 = vmatpush1.msra.mxu0 %v977
  %984 = vmatprep.subr.mxu0 0.0
  %985 = vmatpush1.msra.mxu0 0.0
  %986 = vmatprep.subr.mxu0 0.0
  %987 = vmatpush1.msra.mxu0 0.0
  %988 = vmatprep.subr.mxu0 0.0
  %989 = vmatpush1.msra.mxu0 0.0
  %990 = vmatprep.subr.mxu0 0.0
  %991 = vmatpush1.msra.mxu0 0.0
  %992 = vmatprep.subr.mxu0 0.0
  %993 = vmatpush1.msra.mxu0 0.0
  %994 = vmatprep.subr.mxu0 0.0
  %995 = vmatpush1.msra.mxu0 0.0
  %996 = vmatprep.subr.mxu0 0.0
  %997 = vmatpush1.msra.mxu0 0.0
  %998 = vmatprep.subr.mxu0 0.0
  %999 = vmatpush1.msra.mxu0 0.0
  %1000 = vmatprep.subr.mxu0 0.0
  %1001 = vmatpush1.msra.mxu0 0.0
  %1002 = vmatprep.subr.mxu0 0.0
  %1003 = vmatpush1.msra.mxu0 0.0
  %1004 = vmatprep.subr.mxu0 0.0
  %1005 = vmatpush1.msra.mxu0 0.0
  %1006 = vmatprep.subr.mxu0 0.0
  %1007 = vmatpush1.msra.mxu0 0.0
  %1008 = vmatprep.subr.mxu0 0.0
  %1009 = vmatpush1.msra.mxu0 0.0
  %1010 = vmatprep.subr.mxu0 0.0
  %1011 = vmatpush1.msra.mxu0 0.0
  %1012 = vmatprep.subr.mxu0 0.0
  %1013 = vmatpush1.msra.mxu0 0.0
  %1014 = vmatprep.subr.mxu0 0.0
  %1015 = vmatpush1.msra.mxu0 0.0
  %1016 = vmatprep.subr.mxu0 0.0
  %1017 = vmatpush1.msra.mxu0 0.0
  %1018 = vmatprep.subr.mxu0 0.0
  %1019 = vmatpush1.msra.mxu0 0.0
  %1020 = vmatprep.subr.mxu0 0.0
  %1021 = vmatpush1.msra.mxu0 0.0
  %1022 = vmatprep.subr.mxu0 0.0
  %1023 = vmatpush1.msra.mxu0 0.0
  %1024 = vmatprep.subr.mxu0 0.0
  %1025 = vmatpush1.msra.mxu0 0.0
  %1026 = vmatprep.subr.mxu0 0.0
  %1027 = vmatpush1.msra.mxu0 0.0
  %1028 = vmatprep.subr.mxu0 0.0
  %1029 = vmatpush1.msra.mxu0 0.0
  %1030 = vmatprep.subr.mxu0 0.0
  %1031 = vmatpush1.msra.mxu0 0.0
  %1032 = vmatprep.subr.mxu0 0.0
  %1033 = vmatpush1.msra.mxu0 0.0
  %1034 = vmatprep.subr.mxu0 0.0
  %1035 = vmatpush1.msra.mxu0 0.0
  %1036 = vmatprep.subr.mxu0 0.0
  %1037 = vmatpush1.msra.mxu0 0.0
  %1038 = vmatprep.subr.mxu0 0.0
  %1039 = vmatpush1.msra.mxu0 0.0
  %1040 = vmatprep.subr.mxu0 0.0
  %1041 = vmatpush1.msra.mxu0 0.0
  %1042 = vmatprep.subr.mxu0 0.0
  %1043 = vmatpush1.msra.mxu0 0.0
  %1044 = vmatprep.subr.mxu0 0.0
  %1045 = vmatpush1.msra.mxu0 0.0
  %1046 = vmatprep.mubr.f32.mxu0 0.0
  %1047 = vmatmul.mubr.f32.gmra.mrb[0].mxu0 %v980
  %v1048 = vpop.f32.mrb[0].mxu0
  %v1049 = vadd.f32 0.0, %v1048
  %v1050 = vpop.f32.mrb[0].mxu0
  %1051 = vdwg.mxu0
  %1052 = vrot.lane.b32.xlu0 %v132, 48
  %v1053 = vpop.permute.xlu0 %1052
  %v1056 = vsel %vm140, %v975, 0
  %1058 = vmatprep.subr.mxu0 0.0
  %1059 = vmatpush1.msra.mxu0 %v1053
  %1060 = vmatprep.subr.mxu0 0.0
  %1061 = vmatpush1.msra.mxu0 0.0
  %1062 = vmatprep.subr.mxu0 0.0
  %1063 = vmatpush1.msra.mxu0 0.0
  %1064 = vmatprep.subr.mxu0 0.0
  %1065 = vmatpush1.msra.mxu0 0.0
  %1066 = vmatprep.subr.mxu0 0.0
  %1067 = vmatpush1.msra.mxu0 0.0
  %1068 = vmatprep.subr.mxu0 0.0
  %1069 = vmatpush1.msra.mxu0 0.0
  %1070 = vmatprep.subr.mxu0 0.0
  %1071 = vmatpush1.msra.mxu0 0.0
  %1072 = vmatprep.subr.mxu0 0.0
  %1073 = vmatpush1.msra.mxu0 0.0
  %1074 = vmatprep.subr.mxu0 0.0
  %1075 = vmatpush1.msra.mxu0 0.0
  %1076 = vmatprep.subr.mxu0 0.0
  %1077 = vmatpush1.msra.mxu0 0.0
  %1078 = vmatprep.subr.mxu0 0.0
  %1079 = vmatpush1.msra.mxu0 0.0
  %1080 = vmatprep.subr.mxu0 0.0
  %1081 = vmatpush1.msra.mxu0 0.0
  %1082 = vmatprep.subr.mxu0 0.0
  %1083 = vmatpush1.msra.mxu0 0.0
  %1084 = vmatprep.subr.mxu0 0.0
  %1085 = vmatpush1.msra.mxu0 0.0
  %1086 = vmatprep.subr.mxu0 0.0
  %1087 = vmatpush1.msra.mxu0 0.0
  %1088 = vmatprep.subr.mxu0 0.0
  %1089 = vmatpush1.msra.mxu0 0.0
  %1090 = vmatprep.subr.mxu0 0.0
  %1091 = vmatpush1.msra.mxu0 0.0
  %1092 = vmatprep.subr.mxu0 0.0
  %1093 = vmatpush1.msra.mxu0 0.0
  %1094 = vmatprep.subr.mxu0 0.0
  %1095 = vmatpush1.msra.mxu0 0.0
  %1096 = vmatprep.subr.mxu0 0.0
  %1097 = vmatpush1.msra.mxu0 0.0
  %1098 = vmatprep.subr.mxu0 0.0
  %1099 = vmatpush1.msra.mxu0 0.0
  %1100 = vmatprep.subr.mxu0 0.0
  %1101 = vmatpush1.msra.mxu0 0.0
  %1102 = vmatprep.subr.mxu0 0.0
  %1103 = vmatpush1.msra.mxu0 0.0
  %1104 = vmatprep.subr.mxu0 0.0
  %1105 = vmatpush1.msra.mxu0 0.0
  %1106 = vmatprep.subr.mxu0 0.0
  %1107 = vmatpush1.msra.mxu0 0.0
  %1108 = vmatprep.subr.mxu0 0.0
  %1109 = vmatpush1.msra.mxu0 0.0
  %1110 = vmatprep.subr.mxu0 0.0
  %1111 = vmatpush1.msra.mxu0 0.0
  %1112 = vmatprep.subr.mxu0 0.0
  %1113 = vmatpush1.msra.mxu0 0.0
  %1114 = vmatprep.subr.mxu0 0.0
  %1115 = vmatpush1.msra.mxu0 0.0
  %1116 = vmatprep.subr.mxu0 0.0
  %1117 = vmatpush1.msra.mxu0 0.0
  %1118 = vmatprep.subr.mxu0 0.0
  %1119 = vmatpush1.msra.mxu0 0.0
  %1120 = vmatprep.subr.mxu0 0.0
  %1121 = vmatpush1.msra.mxu0 0.0
  %1122 = vmatprep.mubr.f32.mxu0 0.0
  %1123 = vmatmul.mubr.f32.gmra.mrb[0].mxu0 %v1056
  %v1124 = vpop.f32.mrb[0].mxu0
  %v1125 = vadd.f32 0.0, %v1124
  %v1126 = vpop.f32.mrb[0].mxu0
  %1127 = vdwg.mxu0
  %1128 = vrot.lane.b32.xlu0 %v135, 104
  %v1129 = vpop.permute.xlu0 %1128
  %1130 = vrot.lane.b32.xlu0 %v127, 72
  %v1131 = vpop.permute.xlu0 %1130
  %v1132 = vsel %vm140, %v1129, 0
  %v1134 = vsel %vm140, %v1131, 0
  %1136 = vmatprep.subr.mxu0 0.0
  %1137 = vmatpush1.xpose.msra.mxu0 %v1134
  %1138 = vmatprep.subr.mxu0 0.0
  %1139 = vmatpush1.xpose.msra.mxu0 0.0
  %1140 = vmatprep.subr.mxu0 0.0
  %1141 = vmatpush1.xpose.msra.mxu0 0.0
  %1142 = vmatprep.subr.mxu0 0.0
  %1143 = vmatpush1.xpose.msra.mxu0 0.0
  %1144 = vmatprep.subr.mxu0 0.0
  %1145 = vmatpush1.xpose.msra.mxu0 0.0
  %1146 = vmatprep.subr.mxu0 0.0
  %1147 = vmatpush1.xpose.msra.mxu0 0.0
  %1148 = vmatprep.subr.mxu0 0.0
  %1149 = vmatpush1.xpose.msra.mxu0 0.0
  %1150 = vmatprep.subr.mxu0 0.0
  %1151 = vmatpush1.xpose.msra.mxu0 0.0
  %1152 = vmatprep.subr.mxu0 0.0
  %1153 = vmatpush1.xpose.msra.mxu0 0.0
  %1154 = vmatprep.subr.mxu0 0.0
  %1155 = vmatpush1.xpose.msra.mxu0 0.0
  %1156 = vmatprep.subr.mxu0 0.0
  %1157 = vmatpush1.xpose.msra.mxu0 0.0
  %1158 = vmatprep.subr.mxu0 0.0
  %1159 = vmatpush1.xpose.msra.mxu0 0.0
  %1160 = vmatprep.subr.mxu0 0.0
  %1161 = vmatpush1.xpose.msra.mxu0 0.0
  %1162 = vmatprep.subr.mxu0 0.0
  %1163 = vmatpush1.xpose.msra.mxu0 0.0
  %1164 = vmatprep.subr.mxu0 0.0
  %1165 = vmatpush1.xpose.msra.mxu0 0.0
  %1166 = vmatprep.subr.mxu0 0.0
  %1167 = vmatpush1.xpose.msra.mxu0 0.0
  %1168 = vmatprep.subr.mxu0 0.0
  %1169 = vmatpush1.xpose.msra.mxu0 0.0
  %1170 = vmatprep.subr.mxu0 0.0
  %1171 = vmatpush1.xpose.msra.mxu0 0.0
  %1172 = vmatprep.subr.mxu0 0.0
  %1173 = vmatpush1.xpose.msra.mxu0 0.0
  %1174 = vmatprep.subr.mxu0 0.0
  %1175 = vmatpush1.xpose.msra.mxu0 0.0
  %1176 = vmatprep.subr.mxu0 0.0
  %1177 = vmatpush1.xpose.msra.mxu0 0.0
  %1178 = vmatprep.subr.mxu0 0.0
  %1179 = vmatpush1.xpose.msra.mxu0 0.0
  %1180 = vmatprep.subr.mxu0 0.0
  %1181 = vmatpush1.xpose.msra.mxu0 0.0
  %1182 = vmatprep.subr.mxu0 0.0
  %1183 = vmatpush1.xpose.msra.mxu0 0.0
  %1184 = vmatprep.subr.mxu0 0.0
  %1185 = vmatpush1.xpose.msra.mxu0 0.0
  %1186 = vmatprep.subr.mxu0 0.0
  %1187 = vmatpush1.xpose.msra.mxu0 0.0
  %1188 = vmatprep.subr.mxu0 0.0
  %1189 = vmatpush1.xpose.msra.mxu0 0.0
  %1190 = vmatprep.subr.mxu0 0.0
  %1191 = vmatpush1.xpose.msra.mxu0 0.0
  %1192 = vmatprep.subr.mxu0 0.0
  %1193 = vmatpush1.xpose.msra.mxu0 0.0
  %1194 = vmatprep.subr.mxu0 0.0
  %1195 = vmatpush1.xpose.msra.mxu0 0.0
  %1196 = vmatprep.subr.mxu0 0.0
  %1197 = vmatpush1.xpose.msra.mxu0 0.0
  %1198 = vmatprep.subr.mxu0 0.0
  %1199 = vmatpush1.xpose.msra.mxu0 0.0
  %1200 = vmatprep.mubr.f32.mxu0 0.0
  %1201 = vmatmul.mubr.f32.gmra.mrb[0].mxu0 %v1132
  %v1202 = vpop.f32.mrb[0].mxu0
  %v1203 = vadd.f32 0.0, %v1202
  %v1204 = vpop.f32.mrb[0].mxu0
  %1205 = vdwg.mxu0
  %1206 = vrot.lane.b32.xlu0 %v136, 104
  %v1207 = vpop.permute.xlu0 %1206
  %1208 = vrot.lane.b32.xlu0 %v132, 72
  %v1209 = vpop.permute.xlu0 %1208
  %v1210 = vsel %vm140, %v1207, 0
  %v1212 = vsel %vm140, %v1209, 0
  %1214 = vmatprep.subr.mxu0 0.0
  %1215 = vmatpush1.xpose.msra.mxu0 %v1212
  %1216 = vmatprep.subr.mxu0 0.0
  %1217 = vmatpush1.xpose.msra.mxu0 0.0
  %1218 = vmatprep.subr.mxu0 0.0
  %1219 = vmatpush1.xpose.msra.mxu0 0.0
  %1220 = vmatprep.subr.mxu0 0.0
  %1221 = vmatpush1.xpose.msra.mxu0 0.0
  %1222 = vmatprep.subr.mxu0 0.0
  %1223 = vmatpush1.xpose.msra.mxu0 0.0
  %1224 = vmatprep.subr.mxu0 0.0
  %1225 = vmatpush1.xpose.msra.mxu0 0.0
  %1226 = vmatprep.subr.mxu0 0.0
  %1227 = vmatpush1.xpose.msra.mxu0 0.0
  %1228 = vmatprep.subr.mxu0 0.0
  %1229 = vmatpush1.xpose.msra.mxu0 0.0
  %1230 = vmatprep.subr.mxu0 0.0
  %1231 = vmatpush1.xpose.msra.mxu0 0.0
  %1232 = vmatprep.subr.mxu0 0.0
  %1233 = vmatpush1.xpose.msra.mxu0 0.0
  %1234 = vmatprep.subr.mxu0 0.0
  %1235 = vmatpush1.xpose.msra.mxu0 0.0
  %1236 = vmatprep.subr.mxu0 0.0
  %1237 = vmatpush1.xpose.msra.mxu0 0.0
  %1238 = vmatprep.subr.mxu0 0.0
  %1239 = vmatpush1.xpose.msra.mxu0 0.0
  %1240 = vmatprep.subr.mxu0 0.0
  %1241 = vmatpush1.xpose.msra.mxu0 0.0
  %1242 = vmatprep.subr.mxu0 0.0
  %1243 = vmatpush1.xpose.msra.mxu0 0.0
  %1244 = vmatprep.subr.mxu0 0.0
  %1245 = vmatpush1.xpose.msra.mxu0 0.0
  %1246 = vmatprep.subr.mxu0 0.0
  %1247 = vmatpush1.xpose.msra.mxu0 0.0
  %1248 = vmatprep.subr.mxu0 0.0
  %1249 = vmatpush1.xpose.msra.mxu0 0.0
  %1250 = vmatprep.subr.mxu0 0.0
  %1251 = vmatpush1.xpose.msra.mxu0 0.0
  %1252 = vmatprep.subr.mxu0 0.0
  %1253 = vmatpush1.xpose.msra.mxu0 0.0
  %1254 = vmatprep.subr.mxu0 0.0
  %1255 = vmatpush1.xpose.msra.mxu0 0.0
  %1256 = vmatprep.subr.mxu0 0.0
  %1257 = vmatpush1.xpose.msra.mxu0 0.0
  %1258 = vmatprep.subr.mxu0 0.0
  %1259 = vmatpush1.xpose.msra.mxu0 0.0
  %1260 = vmatprep.subr.mxu0 0.0
  %1261 = vmatpush1.xpose.msra.mxu0 0.0
  %1262 = vmatprep.subr.mxu0 0.0
  %1263 = vmatpush1.xpose.msra.mxu0 0.0
  %1264 = vmatprep.subr.mxu0 0.0
  %1265 = vmatpush1.xpose.msra.mxu0 0.0
  %1266 = vmatprep.subr.mxu0 0.0
  %1267 = vmatpush1.xpose.msra.mxu0 0.0
  %1268 = vmatprep.subr.mxu0 0.0
  %1269 = vmatpush1.xpose.msra.mxu0 0.0
  %1270 = vmatprep.subr.mxu0 0.0
  %1271 = vmatpush1.xpose.msra.mxu0 0.0
  %1272 = vmatprep.subr.mxu0 0.0
  %1273 = vmatpush1.xpose.msra.mxu0 0.0
  %1274 = vmatprep.subr.mxu0 0.0
  %1275 = vmatpush1.xpose.msra.mxu0 0.0
  %1276 = vmatprep.subr.mxu0 0.0
  %1277 = vmatpush1.xpose.msra.mxu0 0.0
  %1278 = vmatprep.mubr.f32.mxu0 0.0
  %1279 = vmatmul.mubr.f32.gmra.mrb[0].mxu0 %v1210
  %v1280 = vpop.f32.mrb[0].mxu0
  %v1281 = vadd.f32 0.0, %v1280
  %v1282 = vpop.f32.mrb[0].mxu0
  %1283 = vdwg.mxu0
  %v1284 = vsel %vm140, %v1203, -inf
  %1285 = vmax.xlane.f32.xlu0 %v1284
  %v1286 = vpop.xlane.xlu0 %1285
  %v1287 = vsel %vm140, %v1281, -inf
  %1288 = vmax.xlane.f32.xlu0 %v1287
  %v1289 = vpop.xlane.xlu0 %1288
  %v1290 = vsub.f32 %v1203, %v1286
  %v1291 = vsub.f32 %v1281, %v1289
  %v1292 = vmul.f32 %v1290, 1.442695
  %v1293 = vpow.pop %v1292
  %v1294 = vmul.f32 %v1291, 1.442695
  %v1295 = vpow.pop %v1294
  %v1296 = vsel %vm140, %v1293, 0.0
  %1297 = vadd.xlane.f32.xlu0 %v1296
  %v1298 = vpop.xlane.xlu0 %1297
  %v1299 = vsel %vm140, %v1295, 0.0
  %1300 = vadd.xlane.f32.xlu0 %v1299
  %v1301 = vpop.xlane.xlu0 %1300
  %v1302 = vrcp.pop %v1298
  %v1303 = vrcp.pop %v1301
  %v1304 = vmul.f32 %v1293, %v1302
  %v1305 = vmul.f32 %v1295, %v1303
  %1306 = vrot.lane.b32.xlu0 %v127, 40
  %v1307 = vpop.permute.xlu0 %1306
  %v1310 = vsel %vm140, %v1304, 0
  %1312 = vmatprep.subr.mxu0 0.0
  %1313 = vmatpush1.msra.mxu0 %v1307
  %1314 = vmatprep.subr.mxu0 0.0
  %1315 = vmatpush1.msra.mxu0 0.0
  %1316 = vmatprep.subr.mxu0 0.0
  %1317 = vmatpush1.msra.mxu0 0.0
  %1318 = vmatprep.subr.mxu0 0.0
  %1319 = vmatpush1.msra.mxu0 0.0
  %1320 = vmatprep.subr.mxu0 0.0
  %1321 = vmatpush1.msra.mxu0 0.0
  %1322 = vmatprep.subr.mxu0 0.0
  %1323 = vmatpush1.msra.mxu0 0.0
  %1324 = vmatprep.subr.mxu0 0.0
  %1325 = vmatpush1.msra.mxu0 0.0
  %1326 = vmatprep.subr.mxu0 0.0
  %1327 = vmatpush1.msra.mxu0 0.0
  %1328 = vmatprep.subr.mxu0 0.0
  %1329 = vmatpush1.msra.mxu0 0.0
  %1330 = vmatprep.subr.mxu0 0.0
  %1331 = vmatpush1.msra.mxu0 0.0
  %1332 = vmatprep.subr.mxu0 0.0
  %1333 = vmatpush1.msra.mxu0 0.0
  %1334 = vmatprep.subr.mxu0 0.0
  %1335 = vmatpush1.msra.mxu0 0.0
  %1336 = vmatprep.subr.mxu0 0.0
  %1337 = vmatpush1.msra.mxu0 0.0
  %1338 = vmatprep.subr.mxu0 0.0
  %1339 = vmatpush1.msra.mxu0 0.0
  %1340 = vmatprep.subr.mxu0 0.0
  %1341 = vmatpush1.msra.mxu0 0.0
  %1342 = vmatprep.subr.mxu0 0.0
  %1343 = vmatpush1.msra.mxu0 0.0
  %1344 = vmatprep.subr.mxu0 0.0
  %1345 = vmatpush1.msra.mxu0 0.0
  %1346 = vmatprep.subr.mxu0 0.0
  %1347 = vmatpush1.msra.mxu0 0.0
  %1348 = vmatprep.subr.mxu0 0.0
  %1349 = vmatpush1.msra.mxu0 0.0
  %1350 = vmatprep.subr.mxu0 0.0
  %1351 = vmatpush1.msra.mxu0 0.0
  %1352 = vmatprep.subr.mxu0 0.0
  %1353 = vmatpush1.msra.mxu0 0.0
  %1354 = vmatprep.subr.mxu0 0.0
  %1355 = vmatpush1.msra.mxu0 0.0
  %1356 = vmatprep.subr.mxu0 0.0
  %1357 = vmatpush1.msra.mxu0 0.0
  %1358 = vmatprep.subr.mxu0 0.0
  %1359 = vmatpush1.msra.mxu0 0.0
  %1360 = vmatprep.subr.mxu0 0.0
  %1361 = vmatpush1.msra.mxu0 0.0
  %1362 = vmatprep.subr.mxu0 0.0
  %1363 = vmatpush1.msra.mxu0 0.0
  %1364 = vmatprep.subr.mxu0 0.0
  %1365 = vmatpush1.msra.mxu0 0.0
  %1366 = vmatprep.subr.mxu0 0.0
  %1367 = vmatpush1.msra.mxu0 0.0
  %1368 = vmatprep.subr.mxu0 0.0
  %1369 = vmatpush1.msra.mxu0 0.0
  %1370 = vmatprep.subr.mxu0 0.0
  %1371 = vmatpush1.msra.mxu0 0.0
  %1372 = vmatprep.subr.mxu0 0.0
  %1373 = vmatpush1.msra.mxu0 0.0
  %1374 = vmatprep.subr.mxu0 0.0
  %1375 = vmatpush1.msra.mxu0 0.0
  %1376 = vmatprep.mubr.f32.mxu0 0.0
  %1377 = vmatmul.mubr.f32.gmra.mrb[0].mxu0 %v1310
  %v1378 = vpop.f32.mrb[0].mxu0
  %v1379 = vadd.f32 0.0, %v1378
  %v1380 = vpop.f32.mrb[0].mxu0
  %1381 = vdwg.mxu0
  %1382 = vrot.lane.b32.xlu0 %v132, 40
  %v1383 = vpop.permute.xlu0 %1382
  %v1386 = vsel %vm140, %v1305, 0
  %1388 = vmatprep.subr.mxu0 0.0
  %1389 = vmatpush1.msra.mxu0 %v1383
  %1390 = vmatprep.subr.mxu0 0.0
  %1391 = vmatpush1.msra.mxu0 0.0
  %1392 = vmatprep.subr.mxu0 0.0
  %1393 = vmatpush1.msra.mxu0 0.0
  %1394 = vmatprep.subr.mxu0 0.0
  %1395 = vmatpush1.msra.mxu0 0.0
  %1396 = vmatprep.subr.mxu0 0.0
  %1397 = vmatpush1.msra.mxu0 0.0
  %1398 = vmatprep.subr.mxu0 0.0
  %1399 = vmatpush1.msra.mxu0 0.0
  %1400 = vmatprep.subr.mxu0 0.0
  %1401 = vmatpush1.msra.mxu0 0.0
  %1402 = vmatprep.subr.mxu0 0.0
  %1403 = vmatpush1.msra.mxu0 0.0
  %1404 = vmatprep.subr.mxu0 0.0
  %1405 = vmatpush1.msra.mxu0 0.0
  %1406 = vmatprep.subr.mxu0 0.0
  %1407 = vmatpush1.msra.mxu0 0.0
  %1408 = vmatprep.subr.mxu0 0.0
  %1409 = vmatpush1.msra.mxu0 0.0
  %1410 = vmatprep.subr.mxu0 0.0
  %1411 = vmatpush1.msra.mxu0 0.0
  %1412 = vmatprep.subr.mxu0 0.0
  %1413 = vmatpush1.msra.mxu0 0.0
  %1414 = vmatprep.subr.mxu0 0.0
  %1415 = vmatpush1.msra.mxu0 0.0
  %1416 = vmatprep.subr.mxu0 0.0
  %1417 = vmatpush1.msra.mxu0 0.0
  %1418 = vmatprep.subr.mxu0 0.0
  %1419 = vmatpush1.msra.mxu0 0.0
  %1420 = vmatprep.subr.mxu0 0.0
  %1421 = vmatpush1.msra.mxu0 0.0
  %1422 = vmatprep.subr.mxu0 0.0
  %1423 = vmatpush1.msra.mxu0 0.0
  %1424 = vmatprep.subr.mxu0 0.0
  %1425 = vmatpush1.msra.mxu0 0.0
  %1426 = vmatprep.subr.mxu0 0.0
  %1427 = vmatpush1.msra.mxu0 0.0
  %1428 = vmatprep.subr.mxu0 0.0
  %1429 = vmatpush1.msra.mxu0 0.0
  %1430 = vmatprep.subr.mxu0 0.0
  %1431 = vmatpush1.msra.mxu0 0.0
  %1432 = vmatprep.subr.mxu0 0.0
  %1433 = vmatpush1.msra.mxu0 0.0
  %1434 = vmatprep.subr.mxu0 0.0
  %1435 = vmatpush1.msra.mxu0 0.0
  %1436 = vmatprep.subr.mxu0 0.0
  %1437 = vmatpush1.msra.mxu0 0.0
  %1438 = vmatprep.subr.mxu0 0.0
  %1439 = vmatpush1.msra.mxu0 0.0
  %1440 = vmatprep.subr.mxu0 0.0
  %1441 = vmatpush1.msra.mxu0 0.0
  %1442 = vmatprep.subr.mxu0 0.0
  %1443 = vmatpush1.msra.mxu0 0.0
  %1444 = vmatprep.subr.mxu0 0.0
  %1445 = vmatpush1.msra.mxu0 0.0
  %1446 = vmatprep.subr.mxu0 0.0
  %1447 = vmatpush1.msra.mxu0 0.0
  %1448 = vmatprep.subr.mxu0 0.0
  %1449 = vmatpush1.msra.mxu0 0.0
  %1450 = vmatprep.subr.mxu0 0.0
  %1451 = vmatpush1.msra.mxu0 0.0
  %1452 = vmatprep.mubr.f32.mxu0 0.0
  %1453 = vmatmul.mubr.f32.gmra.mrb[0].mxu0 %v1386
  %v1454 = vpop.f32.mrb[0].mxu0
  %v1455 = vadd.f32 0.0, %v1454
  %v1456 = vpop.f32.mrb[0].mxu0
  %1457 = vdwg.mxu0
  %1460 = vrot.lane.b32.xlu0 %v719, 8
  %v1461 = vpop.permute.xlu0 %1460
  %1462 = vrot.lane.b32.xlu0 %v795, 8
  %v1463 = vpop.permute.xlu0 %1462
  %1468 = vrot.lane.b32.xlu0 %v1049, 16
  %v1469 = vpop.permute.xlu0 %1468
  %1470 = vrot.lane.b32.xlu0 %v1125, 16
  %v1471 = vpop.permute.xlu0 %1470
  %1476 = vrot.lane.b32.xlu0 %v1379, 24
  %v1477 = vpop.permute.xlu0 %1476
  %1478 = vrot.lane.b32.xlu0 %v1455, 24
  %v1479 = vpop.permute.xlu0 %1478
  %v1482 = vsel %vm140, %v389, %v1461
  %v1483 = vsel %vm140, %v465, %v1463
  %vm1484 = vcmask 130048
  %v1485 = vsel %vm1484, %v1482, %v1469
  %v1486 = vsel %vm1484, %v1483, %v1471
  %vm1487 = vcmask 195584
  %v1488 = vsel %vm1487, %v1485, %v1477
  %v1489 = vsel %vm1487, %v1486, %v1479
  %v1490 = vld [vmem:[%s3] sm:$0xff]
  %v1491 = vld [vmem:[%s3 + $0x8] sm:$0xff]
  %v1492 = vld [vmem:[%s3 + $0x10] sm:$0xff]
  %v1493 = vld [vmem:[%s3 + $0x18] sm:$0xff]
  %v1494 = vld [vmem:[%s4] sm:$0x1]
  %v1496 = vlaneseq
  %v1497 = vshrl.u32 %v1496, 7
  %v1498 = vsub.s32 0, %v1497
  %v1499 = vrot.slane %v1494, %v1498
  %v1502 = vsel %vm53, %v1488, 0
  %v1505 = vsel %vm53, %v1489, 0
  %1507 = vmatprep.subr.mxu0 0.0
  %1508 = vmatpush1.msra.mxu0 %v1490
  %1509 = vmatprep.subr.mxu0 0.0
  %1510 = vmatpush1.msra.mxu0 %v1491
  %1511 = vmatprep.subr.mxu0 0.0
  %1512 = vmatpush1.msra.mxu0 %v1492
  %1513 = vmatprep.subr.mxu0 0.0
  %1514 = vmatpush1.msra.mxu0 %v1493
  %1515 = vmatprep.subr.mxu0 0.0
  %1516 = vmatpush1.msra.mxu0 0.0
  %1517 = vmatprep.subr.mxu0 0.0
  %1518 = vmatpush1.msra.mxu0 0.0
  %1519 = vmatprep.subr.mxu0 0.0
  %1520 = vmatpush1.msra.mxu0 0.0
  %1521 = vmatprep.subr.mxu0 0.0
  %1522 = vmatpush1.msra.mxu0 0.0
  %1523 = vmatprep.subr.mxu0 0.0
  %1524 = vmatpush1.msra.mxu0 0.0
  %1525 = vmatprep.subr.mxu0 0.0
  %1526 = vmatpush1.msra.mxu0 0.0
  %1527 = vmatprep.subr.mxu0 0.0
  %1528 = vmatpush1.msra.mxu0 0.0
  %1529 = vmatprep.subr.mxu0 0.0
  %1530 = vmatpush1.msra.mxu0 0.0
  %1531 = vmatprep.subr.mxu0 0.0
  %1532 = vmatpush1.msra.mxu0 0.0
  %1533 = vmatprep.subr.mxu0 0.0
  %1534 = vmatpush1.msra.mxu0 0.0
  %1535 = vmatprep.subr.mxu0 0.0
  %1536 = vmatpush1.msra.mxu0 0.0
  %1537 = vmatprep.subr.mxu0 0.0
  %1538 = vmatpush1.msra.mxu0 0.0
  %1539 = vmatprep.subr.mxu0 0.0
  %1540 = vmatpush1.msra.mxu0 0.0
  %1541 = vmatprep.subr.mxu0 0.0
  %1542 = vmatpush1.msra.mxu0 0.0
  %1543 = vmatprep.subr.mxu0 0.0
  %1544 = vmatpush1.msra.mxu0 0.0
  %1545 = vmatprep.subr.mxu0 0.0
  %1546 = vmatpush1.msra.mxu0 0.0
  %1547 = vmatprep.subr.mxu0 0.0
  %1548 = vmatpush1.msra.mxu0 0.0
  %1549 = vmatprep.subr.mxu0 0.0
  %1550 = vmatpush1.msra.mxu0 0.0
  %1551 = vmatprep.subr.mxu0 0.0
  %1552 = vmatpush1.msra.mxu0 0.0
  %1553 = vmatprep.subr.mxu0 0.0
  %1554 = vmatpush1.msra.mxu0 0.0
  %1555 = vmatprep.subr.mxu0 0.0
  %1556 = vmatpush1.msra.mxu0 0.0
  %1557 = vmatprep.subr.mxu0 0.0
  %1558 = vmatpush1.msra.mxu0 0.0
  %1559 = vmatprep.subr.mxu0 0.0
  %1560 = vmatpush1.msra.mxu0 0.0
  %1561 = vmatprep.subr.mxu0 0.0
  %1562 = vmatpush1.msra.mxu0 0.0
  %1563 = vmatprep.subr.mxu0 0.0
  %1564 = vmatpush1.msra.mxu0 0.0
  %1565 = vmatprep.subr.mxu0 0.0
  %1566 = vmatpush1.msra.mxu0 0.0
  %1567 = vmatprep.subr.mxu0 0.0
  %1568 = vmatpush1.msra.mxu0 0.0
  %1569 = vmatprep.subr.mxu0 0.0
  %1570 = vmatpush1.msra.mxu0 0.0
  %1571 = vmatprep.mubr.f32.mxu0 0.0
  %1572 = vmatmul.mubr.f32.gmra.mrb[0].mxu0 %v1502
  %v1573 = vpop.f32.mrb[0].mxu0
  %v1574 = vadd.f32 %v1499, %v1573
  %v1575 = vpop.f32.mrb[0].mxu0
  %1576 = vmatprep.mubr.f32.mxu0 0.0
  %1577 = vmatmul.mubr.f32.gmra.mrb[0].mxu0 %v1505
  %v1578 = vpop.f32.mrb[0].mxu0
  %v1579 = vadd.f32 %v1499, %v1578
  %v1580 = vpop.f32.mrb[0].mxu0
  %1581 = vdwg.mxu0
  %v1582 = vadd.f32 %v1574, %v40
  %v1583 = vadd.f32 %v1579, %v41
  %v1584 = vld [vmem:[%s5] sm:$0xff]
  %v1585 = vld [vmem:[%s5 + $0x8] sm:$0xff]
  %v1586 = vld [vmem:[%s5 + $0x10] sm:$0xff]
  %v1587 = vld [vmem:[%s5 + $0x18] sm:$0xff]
  %v1588 = vld [vmem:[%s6] sm:$0x1]
  %v1590 = vlaneseq
  %v1591 = vshrl.u32 %v1590, 7
  %v1592 = vsub.s32 0, %v1591
  %v1593 = vrot.slane %v1588, %v1592
  %v1596 = vsel %vm53, %v1582, 0
  %v1599 = vsel %vm53, %v1583, 0
  %1601 = vmatprep.subr.mxu0 0.0
  %1602 = vmatpush1.msra.mxu0 %v1584
  %1603 = vmatprep.subr.mxu0 0.0
  %1604 = vmatpush1.msra.mxu0 %v1585
  %1605 = vmatprep.subr.mxu0 0.0
  %1606 = vmatpush1.msra.mxu0 %v1586
  %1607 = vmatprep.subr.mxu0 0.0
  %1608 = vmatpush1.msra.mxu0 %v1587
  %1609 = vmatprep.subr.mxu0 0.0
  %1610 = vmatpush1.msra.mxu0 0.0
  %1611 = vmatprep.subr.mxu0 0.0
  %1612 = vmatpush1.msra.mxu0 0.0
  %1613 = vmatprep.subr.mxu0 0.0
  %1614 = vmatpush1.msra.mxu0 0.0
  %1615 = vmatprep.subr.mxu0 0.0
  %1616 = vmatpush1.msra.mxu0 0.0
  %1617 = vmatprep.subr.mxu0 0.0
  %1618 = vmatpush1.msra.mxu0 0.0
  %1619 = vmatprep.subr.mxu0 0.0
  %1620 = vmatpush1.msra.mxu0 0.0
  %1621 = vmatprep.subr.mxu0 0.0
  %1622 = vmatpush1.msra.mxu0 0.0
  %1623 = vmatprep.subr.mxu0 0.0
  %1624 = vmatpush1.msra.mxu0 0.0
  %1625 = vmatprep.subr.mxu0 0.0
  %1626 = vmatpush1.msra.mxu0 0.0
  %1627 = vmatprep.subr.mxu0 0.0
  %1628 = vmatpush1.msra.mxu0 0.0
  %1629 = vmatprep.subr.mxu0 0.0
  %1630 = vmatpush1.msra.mxu0 0.0
  %1631 = vmatprep.subr.mxu0 0.0
  %1632 = vmatpush1.msra.mxu0 0.0
  %1633 = vmatprep.subr.mxu0 0.0
  %1634 = vmatpush1.msra.mxu0 0.0
  %1635 = vmatprep.subr.mxu0 0.0
  %1636 = vmatpush1.msra.mxu0 0.0
  %1637 = vmatprep.subr.mxu0 0.0
  %1638 = vmatpush1.msra.mxu0 0.0
  %1639 = vmatprep.subr.mxu0 0.0
  %1640 = vmatpush1.msra.mxu0 0.0
  %1641 = vmatprep.subr.mxu0 0.0
  %1642 = vmatpush1.msra.mxu0 0.0
  %1643 = vmatprep.subr.mxu0 0.0
  %1644 = vmatpush1.msra.mxu0 0.0
  %1645 = vmatprep.subr.mxu0 0.0
  %1646 = vmatpush1.msra.mxu0 0.0
  %1647 = vmatprep.subr.mxu0 0.0
  %1648 = vmatpush1.msra.mxu0 0.0
  %1649 = vmatprep.subr.mxu0 0.0
  %1650 = vmatpush1.msra.mxu0 0.0
  %1651 = vmatprep.subr.mxu0 0.0
  %1652 = vmatpush1.msra.mxu0 0.0
  %1653 = vmatprep.subr.mxu0 0.0
  %1654 = vmatpush1.msra.mxu0 0.0
  %1655 = vmatprep.subr.mxu0 0.0
  %1656 = vmatpush1.msra.mxu0 0.0
  %1657 = vmatprep.subr.mxu0 0.0
  %1658 = vmatpush1.msra.mxu0 0.0
  %1659 = vmatprep.subr.mxu0 0.0
  %1660 = vmatpush1.msra.mxu0 0.0
  %1661 = vmatprep.subr.mxu0 0.0
  %1662 = vmatpush1.msra.mxu0 0.0
  %1663 = vmatprep.subr.mxu0 0.0
  %1664 = vmatpush1.msra.mxu0 0.0
  %1665 = vmatprep.mubr.f32.mxu0 0.0
  %1666 = vmatmul.mubr.f32.gmra.mrb[0].mxu0 %v1596
  %v1667 = vpop.f32.mrb[0].mxu0
  %v1668 = vadd.f32 %v1593, %v1667
  %v1669 = vpop.f32.mrb[0].mxu0
  %1670 = vmatprep.mubr.f32.mxu0 0.0
  %1671 = vmatmul.mubr.f32.gmra.mrb[0].mxu0 %v1599
  %v1672 = vpop.f32.mrb[0].mxu0
  %v1673 = vadd.f32 %v1593, %v1672
  %v1674 = vpop.f32.mrb[0].mxu0
  %1675 = vdwg.mxu0
  %v1676 = vmax.f32 %v1668, 0.0
  %v1677 = vmax.f32 %v1673, 0.0
  %v1678 = vld [vmem:[%s7] sm:$0xff]
  %v1679 = vld [vmem:[%s7 + $0x8] sm:$0xff]
  %v1680 = vld [vmem:[%s7 + $0x10] sm:$0xff]
  %v1681 = vld [vmem:[%s7 + $0x18] sm:$0xff]
  %v1682 = vld [vmem:[%s7 + $0x20] sm:$0xff]
  %v1683 = vld [vmem:[%s7 + $0x28] sm:$0xff]
  %v1684 = vld [vmem:[%s7 + $0x30] sm:$0xff]
  %v1685 = vld [vmem:[%s7 + $0x38] sm:$0xff]
  %v1686 = vld [vmem:[%s8] sm:$0x1]
  %v1688 = vlaneseq
  %v1689 = vshrl.u32 %v1688, 7
  %v1690 = vsub.s32 0, %v1689
  %v1691 = vrot.slane %v1686, %v1690
  %vm1693 = vcmask 523264
  %v1695 = vsel %vm1693, %v1676, 0
  %v1698 = vsel %vm1693, %v1677, 0
  %1700 = vmatprep.subr.mxu0 0.0
  %1701 = vmatpush1.msra.mxu0 %v1678
  %1702 = vmatprep.subr.mxu0 0.0
  %1703 = vmatpush1.msra.mxu0 %v1679
  %1704 = vmatprep.subr.mxu0 0.0
  %1705 = vmatpush1.msra.mxu0 %v1680
  %1706 = vmatprep.subr.mxu0 0.0
  %1707 = vmatpush1.msra.mxu0 %v1681
  %1708 = vmatprep.subr.mxu0 0.0
  %1709 = vmatpush1.msra.mxu0 %v1682
  %1710 = vmatprep.subr.mxu0 0.0
  %1711 = vmatpush1.msra.mxu0 %v1683
  %1712 = vmatprep.subr.mxu0 0.0
  %1713 = vmatpush1.msra.mxu0 %v1684
  %1714 = vmatprep.subr.mxu0 0.0
  %1715 = vmatpush1.msra.mxu0 %v1685
  %1716 = vmatprep.subr.mxu0 0.0
  %1717 = vmatpush1.msra.mxu0 0.0
  %1718 = vmatprep.subr.mxu0 0.0
  %1719 = vmatpush1.msra.mxu0 0.0
  %1720 = vmatprep.subr.mxu0 0.0
  %1721 = vmatpush1.msra.mxu0 0.0
  %1722 = vmatprep.subr.mxu0 0.0
  %1723 = vmatpush1.msra.mxu0 0.0
  %1724 = vmatprep.subr.mxu0 0.0
  %1725 = vmatpush1.msra.mxu0 0.0
  %1726 = vmatprep.subr.mxu0 0.0
  %1727 = vmatpush1.msra.mxu0 0.0
  %1728 = vmatprep.subr.mxu0 0.0
  %1729 = vmatpush1.msra.mxu0 0.0
  %1730 = vmatprep.subr.mxu0 0.0
  %1731 = vmatpush1.msra.mxu0 0.0
  %1732 = vmatprep.subr.mxu0 0.0
  %1733 = vmatpush1.msra.mxu0 0.0
  %1734 = vmatprep.subr.mxu0 0.0
  %1735 = vmatpush1.msra.mxu0 0.0
  %1736 = vmatprep.subr.mxu0 0.0
  %1737 = vmatpush1.msra.mxu0 0.0
  %1738 = vmatprep.subr.mxu0 0.0
  %1739 = vmatpush1.msra.mxu0 0.0
  %1740 = vmatprep.subr.mxu0 0.0
  %1741 = vmatpush1.msra.mxu0 0.0
  %1742 = vmatprep.subr.mxu0 0.0
  %1743 = vmatpush1.msra.mxu0 0.0
  %1744 = vmatprep.subr.mxu0 0.0
  %1745 = vmatpush1.msra.mxu0 0.0
  %1746 = vmatprep.subr.mxu0 0.0
  %1747 = vmatpush1.msra.mxu0 0.0
  %1748 = vmatprep.subr.mxu0 0.0
  %1749 = vmatpush1.msra.mxu0 0.0
  %1750 = vmatprep.subr.mxu0 0.0
  %1751 = vmatpush1.msra.mxu0 0.0
  %1752 = vmatprep.subr.mxu0 0.0
  %1753 = vmatpush1.msra.mxu0 0.0
  %1754 = vmatprep.subr.mxu0 0.0
  %1755 = vmatpush1.msra.mxu0 0.0
  %1756 = vmatprep.subr.mxu0 0.0
  %1757 = vmatpush1.msra.mxu0 0.0
  %1758 = vmatprep.subr.mxu0 0.0
  %1759 = vmatpush1.msra.mxu0 0.0
  %1760 = vmatprep.subr.mxu0 0.0
  %1761 = vmatpush1.msra.mxu0 0.0
  %1762 = vmatprep.subr.mxu0 0.0
  %1763 = vmatpush1.msra.mxu0 0.0
  %1764 = vmatprep.mubr.f32.mxu0 0.0
  %1765 = vmatmul.mubr.f32.gmra.mrb[0].mxu0 %v1695
  %v1766 = vpop.f32.mrb[0].mxu0
  %v1767 = vadd.f32 %v1691, %v1766
  %v1768 = vpop.f32.mrb[0].mxu0
  %1769 = vmatprep.mubr.f32.mxu0 0.0
  %1770 = vmatmul.mubr.f32.gmra.mrb[0].mxu0 %v1698
  %v1771 = vpop.f32.mrb[0].mxu0
  %v1772 = vadd.f32 %v1691, %v1771
  %v1773 = vpop.f32.mrb[0].mxu0
  %1774 = vdwg.mxu0
  %v1775 = vadd.f32 %v1582, %v1767
  %v1776 = vadd.f32 %v1583, %v1772
  %v1777 = vld [vmem:[%s9] sm:$0xff]
  %v1778 = vld [vmem:[%s9 + $0x8] sm:$0xff]
  %v1779 = vld [vmem:[%s9 + $0x10] sm:$0xff]
  %v1780 = vld [vmem:[%s9 + $0x18] sm:$0xff]
  %v1781 = vld [vmem:[%s10] sm:$0x1]
  %v1783 = vlaneseq
  %v1784 = vshrl.u32 %v1783, 7
  %v1785 = vsub.s32 0, %v1784
  %v1786 = vrot.slane %v1781, %v1785
  %v1789 = vsel %vm53, %v1775, 0
  %v1792 = vsel %vm53, %v1776, 0
  %1794 = vmatprep.subr.mxu0 0.0
  %1795 = vmatpush1.msra.mxu0 %v1777
  %1796 = vmatprep.subr.mxu0 0.0
  %1797 = vmatpush1.msra.mxu0 %v1778
  %1798 = vmatprep.subr.mxu0 0.0
  %1799 = vmatpush1.msra.mxu0 %v1779
  %1800 = vmatprep.subr.mxu0 0.0
  %1801 = vmatpush1.msra.mxu0 %v1780
  %1802 = vmatprep.subr.mxu0 0.0
  %1803 = vmatpush1.msra.mxu0 0.0
  %1804 = vmatprep.subr.mxu0 0.0
  %1805 = vmatpush1.msra.mxu0 0.0
  %1806 = vmatprep.subr.mxu0 0.0
  %1807 = vmatpush1.msra.mxu0 0.0
  %1808 = vmatprep.subr.mxu0 0.0
  %1809 = vmatpush1.msra.mxu0 0.0
  %1810 = vmatprep.subr.mxu0 0.0
  %1811 = vmatpush1.msra.mxu0 0.0
  %1812 = vmatprep.subr.mxu0 0.0
  %1813 = vmatpush1.msra.mxu0 0.0
  %1814 = vmatprep.subr.mxu0 0.0
  %1815 = vmatpush1.msra.mxu0 0.0
  %1816 = vmatprep.subr.mxu0 0.0
  %1817 = vmatpush1.msra.mxu0 0.0
  %1818 = vmatprep.subr.mxu0 0.0
  %1819 = vmatpush1.msra.mxu0 0.0
  %1820 = vmatprep.subr.mxu0 0.0
  %1821 = vmatpush1.msra.mxu0 0.0
  %1822 = vmatprep.subr.mxu0 0.0
  %1823 = vmatpush1.msra.mxu0 0.0
  %1824 = vmatprep.subr.mxu0 0.0
  %1825 = vmatpush1.msra.mxu0 0.0
  %1826 = vmatprep.subr.mxu0 0.0
  %1827 = vmatpush1.msra.mxu0 0.0
  %1828 = vmatprep.subr.mxu0 0.0
  %1829 = vmatpush1.msra.mxu0 0.0
  %1830 = vmatprep.subr.mxu0 0.0
  %1831 = vmatpush1.msra.mxu0 0.0
  %1832 = vmatprep.subr.mxu0 0.0
  %1833 = vmatpush1.msra.mxu0 0.0
  %1834 = vmatprep.subr.mxu0 0.0
  %1835 = vmatpush1.msra.mxu0 0.0
  %1836 = vmatprep.subr.mxu0 0.0
  %1837 = vmatpush1.msra.mxu0 0.0
  %1838 = vmatprep.subr.mxu0 0.0
  %1839 = vmatpush1.msra.mxu0 0.0
  %1840 = vmatprep.subr.mxu0 0.0
  %1841 = vmatpush1.msra.mxu0 0.0
  %1842 = vmatprep.subr.mxu0 0.0
  %1843 = vmatpush1.msra.mxu0 0.0
  %1844 = vmatprep.subr.mxu0 0.0
  %1845 = vmatpush1.msra.mxu0 0.0
  %1846 = vmatprep.subr.mxu0 0.0
  %1847 = vmatpush1.msra.mxu0 0.0
  %1848 = vmatprep.subr.mxu0 0.0
  %1849 = vmatpush1.msra.mxu0 0.0
  %1850 = vmatprep.subr.mxu0 0.0
  %1851 = vmatpush1.msra.mxu0 0.0
  %1852 = vmatprep.subr.mxu0 0.0
  %1853 = vmatpush1.msra.mxu0 0.0
  %1854 = vmatprep.subr.mxu0 0.0
  %1855 = vmatpush1.msra.mxu0 0.0
  %1856 = vmatprep.subr.mxu0 0.0
  %1857 = vmatpush1.msra.mxu0 0.0
  %1858 = vmatprep.mubr.f32.mxu0 0.0
  %1859 = vmatmul.mubr.f32.gmra.mrb[0].mxu0 %v1789
  %v1860 = vpop.f32.mrb[0].mxu0
  %v1861 = vadd.f32 %v1786, %v1860
  %v1862 = vpop.f32.mrb[0].mxu0
  %1863 = vmatprep.mubr.f32.mxu0 0.0
  %1864 = vmatmul.mubr.f32.gmra.mrb[0].mxu0 %v1792
  %v1865 = vpop.f32.mrb[0].mxu0
  %v1866 = vadd.f32 %v1786, %v1865
  %v1867 = vpop.f32.mrb[0].mxu0
  %1868 = vdwg.mxu0
  %1869 = vst.msk [vmem:[%s11] sm:$0xff] %vm1484, %v1861
  %1870 = vst.msk [vmem:[%s11 + $0x8] sm:$0xff] %vm1484, %v1866
  %v1871 = vsel %vm1484, %v1861, 0.0
  %v1872 = vsel %vm1484, %v1866, 0.0
  %v1873 = vadd.f32 %v1871, %v1872
  %v1874 = vrot.slane %v1873, 4
  %v1875 = vadd.f32 %v1873, %v1874
  %v1876 = vrot.slane %v1875, 2
  %v1877 = vadd.f32 %v1875, %v1876
  %v1878 = vrot.slane %v1877, 1
  %v1879 = vadd.f32 %v1877, %v1878
  %v1880 = vmul.f32 %v1861, %v1861
  %v1881 = vmul.f32 %v1866, %v1866
  %v1882 = vsel %vm1484, %v1880, 0.0
  %v1883 = vsel %vm1484, %v1881, 0.0
  %v1884 = vadd.f32 %v1882, %v1883
  %v1885 = vrot.slane %v1884, 4
  %v1886 = vadd.f32 %v1884, %v1885
  %v1887 = vrot.slane %v1886, 2
  %v1888 = vadd.f32 %v1886, %v1887
  %v1889 = vrot.slane %v1888, 1
  %v1890 = vadd.f32 %v1888, %v1889
  %vm1891 = vcmask 1040384
  %v1892 = vsel %vm1891, %v1879, %v1890
  %vm1893 = vcmask 123904
  %1894 = vst.msk [vmem:[%s12] sm:$0x3] %vm1893, %v1892
  // Predicated region
  $region46: #{attention3d_forward.2} parent=0 // pred_check
    _
  $region47: #{attention3d_forward.2} parent=0 // pred_check_branch
    %1896 = sbr.rel (0) target = $region49
  $region48: #{attention3d_forward.2} parent=0 // pred_region
    _
  $region49: #{attention3d_forward.2} parent=0 // pred_fallthru
    _
  // Predicated region
  $region50: #{attention3d_forward.2} parent=0 // pred_check
    _
  $region51: #{attention3d_forward.2} parent=0 // pred_check_branch
    %1898 = sbr.rel (0) target = $region53
  $region52: #{attention3d_forward.2} parent=0 // pred_region
    _
  $region53: #{attention3d_forward.2} parent=0 // pred_fallthru
    _
  // Predicated region
  $region54: #{attention3d_forward.2} parent=0 // pred_check
    _
  $region55: #{attention3d_forward.2} parent=0 // pred_check_branch
    %1900 = sbr.rel (0) target = $region57
  $region56: #{attention3d_forward.2} parent=0 // pred_region
    _
  $region57: #{attention3d_forward.2} parent=0 // pred_fallthru
    _
  // Predicated region
  $region58: #{attention3d_forward.2} parent=0 // pred_check
    _
  $region59: #{attention3d_forward.2} parent=0 // pred_check_branch
    %1902 = sbr.rel (0) target = $region61
  $region60: #{attention3d_forward.2} parent=0 // pred_region
    _
  $region61: #{attention3d_forward.2} parent=0 // pred_fallthru
    _

</llo_original>
